<compile_context>
chip_gen: v7x
topology: tpu7x:2x2x1
jax: 0.10.0
libtpu: 0.0.40
codegen_flags: <defaults>
</compile_context>

<pallas_src>
import jax
import jax.numpy as jnp
from jax import lax
from jax.experimental import pallas as pl
from jax.experimental.pallas import tpu as pltpu


def _round_up(v, m):
    return (v + m - 1) // m * m


def _pack_rnn_weight(w, H, Hpad, in_pad):
    """PyTorch (3H, in_dim) gate-stacked weight -> (in_pad, 3*Hpad), gate-padded."""
    in_dim = w.shape[1]
    gates = []
    for g in range(3):
        gt = w[g * H:(g + 1) * H].T                       # (in_dim, H)
        gates.append(jnp.pad(gt, ((0, in_pad - in_dim), (0, Hpad - H))))
    return jnp.concatenate(gates, axis=1)                 # (in_pad, 3*Hpad)


def _pack_rnn_bias(b, H, Hpad):
    """PyTorch (3H,) gate-stacked bias -> (1, 3*Hpad), gate-padded."""
    gates = [jnp.pad(b[g * H:(g + 1) * H], (0, Hpad - H)) for g in range(3)]
    return jnp.concatenate(gates)[None, :]


# -----------------------------------------------------------------------------
# Kernel: full GRUNet forward for one batch tile.
#   x_ref     : (T, TB, Ipad)    bf16 time-major inputs
#   wi_ref    : (Ipad, 3*Hpad)   bf16 input->gates weights  [r|z|n]
#   wh_ref    : (Hpad, 3*Hpad)   bf16 hidden->gates weights [r|z|n]
#   bi_ref    : (1, 3*Hpad)      f32
#   bh_ref    : (1, 3*Hpad)      f32
#   wf_ref    : (Hpad, Cpad)     bf16 classifier weight (pre-transposed)
#   bf_ref    : (1, Cpad)        f32
#   out_ref   : (TB, Cpad)       f32
#   xproj_scr : (T, TB, 3*Hpad)  f32 VMEM scratch (precomputed input gates)
# -----------------------------------------------------------------------------
def grunet_kernel(x_ref, wi_ref, wh_ref, bi_ref, bh_ref, wf_ref, bf_ref,
                  out_ref, xproj_scr):
    T, TB, _ = x_ref.shape
    H3 = xproj_scr.shape[-1]
    H = H3 // 3

    # ---- Input projections for every timestep: one big MXU matmul, hoisted
    #      out of the sequential recurrence (bf16 operands, f32 accumulate).
    #      Reshape only collapses leading dims (TB % 16 == 0) -> layout no-op.
    x_flat = x_ref[...].reshape(T * TB, x_ref.shape[-1])          # bf16
    xproj = jnp.dot(x_flat, wi_ref[...], preferred_element_type=jnp.float32)
    xproj = xproj + bi_ref[...]                                   # (T*TB, 3H)
    xproj_scr[...] = xproj.reshape(T, TB, H3)

    bh = bh_ref[...]                                              # hoisted bias load

    # ---- Sequential GRU recurrence (h carried in vregs, f32 gate math).
    #      fori_loop(unroll=True) -> static step indices, LLO can schedule
    #      across the whole unrolled body.
    def step(t, h):
        xp = xproj_scr[t]                                         # (TB, 3H) f32
        hp = jnp.dot(h.astype(jnp.bfloat16), wh_ref[...],
                     preferred_element_type=jnp.float32) + bh
        r = jax.nn.sigmoid(xp[:, :H] + hp[:, :H])
        z = jax.nn.sigmoid(xp[:, H:2 * H] + hp[:, H:2 * H])
        # PyTorch GRU: n = tanh(W_in x + b_in + r * (W_hn h + b_hn));
        # bh was folded into hp, so r * hp[:, 2H:] is exactly r*(W_hn h + b_hn).
        n = jnp.tanh(xp[:, 2 * H:] + r * hp[:, 2 * H:])
        return (1.0 - z) * n + z * h

    h_last = lax.fori_loop(0, T, step, jnp.zeros((TB, H), jnp.float32),
                           unroll=True)

    # relu -> dropout (identity at inference) -> relu  ==  relu
    # TODO(synk): nn.Dropout is a train-time op; inference forward is identity.
    h_last = jnp.maximum(h_last, 0.0)

    # ---- Classifier (lane-dense MXU matmul, unmasked full-lane store).
    out_ref[...] = (jnp.dot(h_last.astype(jnp.bfloat16), wf_ref[...],
                            preferred_element_type=jnp.float32) + bf_ref[...])


def grunet_forward(x, w_ih, w_hh, b_ih, b_hh, w_fc, b_fc, *, batch_tile=128):
    B, T, I = x.shape
    H = w_hh.shape[1]
    C = w_fc.shape[0]

    Ipad = _round_up(I, 128)
    Hpad = _round_up(H, 128)
    Cpad = _round_up(C, 128)
    # 16-row alignment keeps the bf16 input block on native (16,128) tiles.
    TB = min(_round_up(B, 16), _round_up(batch_tile, 16))
    Bpad = _round_up(B, TB)

    # Time-major, zero-padded inputs, stored bf16 (halves input HBM traffic;
    # the in-kernel matmul consumes bf16 regardless).
    xt = jnp.transpose(x.astype(jnp.float32), (1, 0, 2))       # (T, B, I)
    xt = jnp.pad(xt, ((0, 0), (0, Bpad - B), (0, Ipad - I))).astype(jnp.bfloat16)

    wi = _pack_rnn_weight(w_ih, H, Hpad, Ipad).astype(jnp.bfloat16)
    wh = _pack_rnn_weight(w_hh, H, Hpad, Hpad).astype(jnp.bfloat16)
    bi = _pack_rnn_bias(b_ih, H, Hpad).astype(jnp.float32)
    bh = _pack_rnn_bias(b_hh, H, Hpad).astype(jnp.float32)
    wf = jnp.pad(w_fc.T.astype(jnp.float32),
                 ((0, Hpad - H), (0, Cpad - C))).astype(jnp.bfloat16)
    bf = jnp.pad(b_fc.astype(jnp.float32), (0, Cpad - C))[None, :]

    grid = (Bpad // TB,)
    flops = (2 * Bpad * T * Ipad * 3 * Hpad        # input projections
             + 2 * Bpad * T * Hpad * 3 * Hpad      # recurrent projections
             + 2 * Bpad * Hpad * Cpad)             # classifier
    transcendentals = Bpad * T * 3 * Hpad
    bytes_accessed = int(xt.size * 2 + wi.size * 2 + wh.size * 2 + wf.size * 2
                         + (bi.size + bh.size + bf.size) * 4 + Bpad * Cpad * 4)

    out = pl.pallas_call(
        grunet_kernel,
        out_shape=jax.ShapeDtypeStruct((Bpad, Cpad), jnp.float32),
        grid_spec=pltpu.PrefetchScalarGridSpec(
            num_scalar_prefetch=0,
            grid=grid,
            in_specs=[
                pl.BlockSpec((T, TB, Ipad), lambda b: (0, b, 0)),     # x
                pl.BlockSpec((Ipad, 3 * Hpad), lambda b: (0, 0)),     # W_ih^T
                pl.BlockSpec((Hpad, 3 * Hpad), lambda b: (0, 0)),     # W_hh^T
                pl.BlockSpec((1, 3 * Hpad), lambda b: (0, 0)),        # b_ih
                pl.BlockSpec((1, 3 * Hpad), lambda b: (0, 0)),        # b_hh
                pl.BlockSpec((Hpad, Cpad), lambda b: (0, 0)),         # W_fc^T
                pl.BlockSpec((1, Cpad), lambda b: (0, 0)),            # b_fc
            ],
            out_specs=pl.BlockSpec((TB, Cpad), lambda b: (b, 0)),
            scratch_shapes=[pltpu.VMEM((T, TB, 3 * Hpad), jnp.float32)],
        ),
        compiler_params=pltpu.CompilerParams(
            dimension_semantics=("parallel",)),
        cost_estimate=pl.CostEstimate(
            flops=flops, transcendentals=transcendentals,
            bytes_accessed=bytes_accessed),
    )(xt, wi, wh, bi, bh, wf, bf)

    return out[:B, :C]


def ref_forward(x, w_ih, w_hh, b_ih, b_hh, w_fc, b_fc):
    """Pure-JAX f32 reference matching torch.nn.GRU(batch_first=True) + head."""
    B, T, _ = x.shape
    H = w_hh.shape[1]

    def step(h, xt):
        gi = xt @ w_ih.T + b_ih
        gh = h @ w_hh.T + b_hh
        r = jax.nn.sigmoid(gi[:, :H] + gh[:, :H])
        z = jax.nn.sigmoid(gi[:, H:2 * H] + gh[:, H:2 * H])
        n = jnp.tanh(gi[:, 2 * H:] + r * gh[:, 2 * H:])
        return (1.0 - z) * n + z * h, None

    h_last, _ = lax.scan(step, jnp.zeros((B, H), jnp.float32),
                         jnp.swapaxes(x, 0, 1))
    h_last = jnp.maximum(h_last, 0.0)        # relu -> dropout(id) -> relu
    return h_last @ w_fc.T + b_fc


if __name__ == "__main__":
    input_size, hidden_size, num_class = 16, 32, 4
    B, T = 16, 8

    key = jax.random.PRNGKey(0)
    keys = jax.random.split(key, 7)
    k = 1.0 / float(hidden_size) ** 0.5      # PyTorch default init bound

    x = jax.random.normal(keys[0], (B, T, input_size), jnp.float32)
    w_ih = jax.random.uniform(keys[1], (3 * hidden_size, input_size),
                              jnp.float32, -k, k)
    w_hh = jax.random.uniform(keys[2], (3 * hidden_size, hidden_size),
                              jnp.float32, -k, k)
    b_ih = jax.random.uniform(keys[3], (3 * hidden_size,), jnp.float32, -k, k)
    b_hh = jax.random.uniform(keys[4], (3 * hidden_size,), jnp.float32, -k, k)
    w_fc = jax.random.uniform(keys[5], (num_class, hidden_size),
                              jnp.float32, -k, k)
    b_fc = jax.random.uniform(keys[6], (num_class,), jnp.float32, -k, k)

    out = grunet_forward(x, w_ih, w_hh, b_ih, b_hh, w_fc, b_fc)
    out = jax.block_until_ready(out)

    expected = ref_forward(x, w_ih, w_hh, b_ih, b_hh, w_fc, b_fc)
    assert out.shape == (B, num_class)
    assert jnp.allclose(out, expected, rtol=2e-2, atol=2e-2), (out, expected)

    print("KERNEL_OK")
</pallas_src>

<mosaic_0001>
module attributes {stable_mosaic.version = 11 : i64} {
  func.func @grunet_kernel(%arg0: i32, %arg1: memref<8x16x128xbf16, #tpu.memory_space<vmem>>, %arg2: memref<128x384xbf16, #tpu.memory_space<vmem>>, %arg3: memref<128x384xbf16, #tpu.memory_space<vmem>>, %arg4: memref<1x384xf32, #tpu.memory_space<vmem>>, %arg5: memref<1x384xf32, #tpu.memory_space<vmem>>, %arg6: memref<128x128xbf16, #tpu.memory_space<vmem>>, %arg7: memref<1x128xf32, #tpu.memory_space<vmem>>, %arg8: memref<16x128xf32, #tpu.memory_space<vmem>>, %arg9: memref<8x16x384xf32, #tpu.memory_space<vmem>>) attributes {dimension_semantics = [#tpu.dimension_semantics<parallel>], iteration_bounds = array<i64: 1>, scalar_prefetch = 0 : i64, scratch_operands = 1 : i64, tpu.core_type = #tpu.core_type<tc>, window_params = [{transform_indices = @transform_0, window_bounds = array<i64: 8, 16, 128>}, {pipeline_mode = #tpu.pipeline_mode<synchronous>, transform_indices = @transform_1, window_bounds = array<i64: 128, 384>}, {pipeline_mode = #tpu.pipeline_mode<synchronous>, transform_indices = @transform_2, window_bounds = array<i64: 128, 384>}, {pipeline_mode = #tpu.pipeline_mode<synchronous>, transform_indices = @transform_3, window_bounds = array<i64: 1, 384>}, {pipeline_mode = #tpu.pipeline_mode<synchronous>, transform_indices = @transform_4, window_bounds = array<i64: 1, 384>}, {pipeline_mode = #tpu.pipeline_mode<synchronous>, transform_indices = @transform_5, window_bounds = array<i64: 128, 128>}, {pipeline_mode = #tpu.pipeline_mode<synchronous>, transform_indices = @transform_6, window_bounds = array<i64: 1, 128>}, {transform_indices = @transform_7, window_bounds = array<i64: 16, 128>}]} {
    %c0 = arith.constant 0 : index
    %c0_0 = arith.constant 0 : index
    %c0_1 = arith.constant 0 : index
    %0 = vector.load %arg1[%c0, %c0_0, %c0_1] : memref<8x16x128xbf16, #tpu.memory_space<vmem>>, vector<8x16x128xbf16>
    %1 = vector.shape_cast %0 : vector<8x16x128xbf16> to vector<128x128xbf16>
    %c0_2 = arith.constant 0 : index
    %c0_3 = arith.constant 0 : index
    %2 = vector.load %arg2[%c0_2, %c0_3] : memref<128x384xbf16, #tpu.memory_space<vmem>>, vector<128x384xbf16>
    %cst = arith.constant dense<0.000000e+00> : vector<128x384xf32>
    %3 = tpu.matmul %1, %2, %cst {dimension_numbers = #tpu.dot_dimension_numbers<[1], [0], [0], [1], [0, 0, 1, 1], [], []>} : vector<128x128xbf16>, vector<128x384xbf16>, vector<128x384xf32> -> vector<128x384xf32>
    %c0_4 = arith.constant 0 : index
    %c0_5 = arith.constant 0 : index
    %4 = vector.load %arg4[%c0_4, %c0_5] : memref<1x384xf32, #tpu.memory_space<vmem>>, vector<1x384xf32>
    %5 = vector.broadcast %4 : vector<1x384xf32> to vector<128x384xf32>
    %6 = arith.addf %3, %5 : vector<128x384xf32>
    %7 = vector.shape_cast %6 : vector<128x384xf32> to vector<8x16x384xf32>
    %c0_6 = arith.constant 0 : index
    %c0_7 = arith.constant 0 : index
    %c0_8 = arith.constant 0 : index
    %8 = vector.load %arg9[%c0_6, %c0_7, %c0_8] : memref<8x16x384xf32, #tpu.memory_space<vmem>>, vector<8x16x384xf32>
    tpu.vector_store %arg9[%c0_6, %c0_7, %c0_8], %7 {strides = array<i32>} : memref<8x16x384xf32, #tpu.memory_space<vmem>>, vector<8x16x384xf32>,
    %c0_9 = arith.constant 0 : index
    %c0_10 = arith.constant 0 : index
    %9 = vector.load %arg5[%c0_9, %c0_10] : memref<1x384xf32, #tpu.memory_space<vmem>>, vector<1x384xf32>
    %cst_11 = arith.constant 0.000000e+00 : f32
    %10 = vector.broadcast %cst_11 : f32 to vector<16x128xf32>
    %c0_i32 = arith.constant 0 : i32
    %11 = arith.index_cast %c0_i32 : i32 to index
    %c0_12 = arith.constant 0 : index
    %c0_13 = arith.constant 0 : index
    %12 = vector.load %arg9[%11, %c0_12, %c0_13] : memref<8x16x384xf32, #tpu.memory_space<vmem>>, vector<1x16x384xf32>
    %13 = vector.shape_cast %12 : vector<1x16x384xf32> to vector<16x384xf32>
    %14 = arith.truncf %10 : vector<16x128xf32> to vector<16x128xbf16>
    %c0_14 = arith.constant 0 : index
    %c0_15 = arith.constant 0 : index
    %15 = vector.load %arg3[%c0_14, %c0_15] : memref<128x384xbf16, #tpu.memory_space<vmem>>, vector<128x384xbf16>
    %cst_16 = arith.constant dense<0.000000e+00> : vector<16x384xf32>
    %16 = tpu.matmul %14, %15, %cst_16 {dimension_numbers = #tpu.dot_dimension_numbers<[1], [0], [0], [1], [0, 0, 1, 1], [], []>} : vector<16x128xbf16>, vector<128x384xbf16>, vector<16x384xf32> -> vector<16x384xf32>
    %17 = vector.broadcast %9 : vector<1x384xf32> to vector<16x384xf32>
    %18 = arith.addf %16, %17 : vector<16x384xf32>
    %19 = vector.extract_strided_slice %13 {offsets = [0, 0], sizes = [16, 128], strides = [1, 1]} : vector<16x384xf32> to vector<16x128xf32>
    %20 = vector.extract_strided_slice %18 {offsets = [0, 0], sizes = [16, 128], strides = [1, 1]} : vector<16x384xf32> to vector<16x128xf32>
    %21 = arith.addf %19, %20 : vector<16x128xf32>
    %22 = arith.negf %21 : vector<16x128xf32>
    %23 = math.exp %22 : vector<16x128xf32>
    %cst_17 = arith.constant 1.000000e+00 : f32
    %24 = vector.broadcast %cst_17 : f32 to vector<16x128xf32>
    %25 = arith.addf %24, %23 : vector<16x128xf32>
    %26 = arith.divf %24, %25 : vector<16x128xf32>
    %27 = vector.extract_strided_slice %13 {offsets = [0, 128], sizes = [16, 128], strides = [1, 1]} : vector<16x384xf32> to vector<16x128xf32>
    %28 = vector.extract_strided_slice %18 {offsets = [0, 128], sizes = [16, 128], strides = [1, 1]} : vector<16x384xf32> to vector<16x128xf32>
    %29 = arith.addf %27, %28 : vector<16x128xf32>
    %30 = arith.negf %29 : vector<16x128xf32>
    %31 = math.exp %30 : vector<16x128xf32>
    %cst_18 = arith.constant 1.000000e+00 : f32
    %32 = vector.broadcast %cst_18 : f32 to vector<16x128xf32>
    %33 = arith.addf %32, %31 : vector<16x128xf32>
    %34 = arith.divf %32, %33 : vector<16x128xf32>
    %35 = vector.extract_strided_slice %13 {offsets = [0, 256], sizes = [16, 128], strides = [1, 1]} : vector<16x384xf32> to vector<16x128xf32>
    %36 = vector.extract_strided_slice %18 {offsets = [0, 256], sizes = [16, 128], strides = [1, 1]} : vector<16x384xf32> to vector<16x128xf32>
    %37 = arith.mulf %26, %36 : vector<16x128xf32>
    %38 = arith.addf %35, %37 : vector<16x128xf32>
    %39 = math.tanh %38 : vector<16x128xf32>
    %cst_19 = arith.constant 1.000000e+00 : f32
    %40 = vector.broadcast %cst_19 : f32 to vector<16x128xf32>
    %41 = arith.subf %40, %34 : vector<16x128xf32>
    %42 = arith.mulf %41, %39 : vector<16x128xf32>
    %43 = arith.mulf %34, %10 : vector<16x128xf32>
    %44 = arith.addf %42, %43 : vector<16x128xf32>
    %c1_i32 = arith.constant 1 : i32
    %45 = arith.index_cast %c1_i32 : i32 to index
    %c0_20 = arith.constant 0 : index
    %c0_21 = arith.constant 0 : index
    %46 = vector.load %arg9[%45, %c0_20, %c0_21] : memref<8x16x384xf32, #tpu.memory_space<vmem>>, vector<1x16x384xf32>
    %47 = vector.shape_cast %46 : vector<1x16x384xf32> to vector<16x384xf32>
    %48 = arith.truncf %44 : vector<16x128xf32> to vector<16x128xbf16>
    %c0_22 = arith.constant 0 : index
    %c0_23 = arith.constant 0 : index
    %49 = vector.load %arg3[%c0_22, %c0_23] : memref<128x384xbf16, #tpu.memory_space<vmem>>, vector<128x384xbf16>
    %cst_24 = arith.constant dense<0.000000e+00> : vector<16x384xf32>
    %50 = tpu.matmul %48, %49, %cst_24 {dimension_numbers = #tpu.dot_dimension_numbers<[1], [0], [0], [1], [0, 0, 1, 1], [], []>} : vector<16x128xbf16>, vector<128x384xbf16>, vector<16x384xf32> -> vector<16x384xf32>
    %51 = vector.broadcast %9 : vector<1x384xf32> to vector<16x384xf32>
    %52 = arith.addf %50, %51 : vector<16x384xf32>
    %53 = vector.extract_strided_slice %47 {offsets = [0, 0], sizes = [16, 128], strides = [1, 1]} : vector<16x384xf32> to vector<16x128xf32>
    %54 = vector.extract_strided_slice %52 {offsets = [0, 0], sizes = [16, 128], strides = [1, 1]} : vector<16x384xf32> to vector<16x128xf32>
    %55 = arith.addf %53, %54 : vector<16x128xf32>
    %56 = arith.negf %55 : vector<16x128xf32>
    %57 = math.exp %56 : vector<16x128xf32>
    %cst_25 = arith.constant 1.000000e+00 : f32
    %58 = vector.broadcast %cst_25 : f32 to vector<16x128xf32>
    %59 = arith.addf %58, %57 : vector<16x128xf32>
    %60 = arith.divf %58, %59 : vector<16x128xf32>
    %61 = vector.extract_strided_slice %47 {offsets = [0, 128], sizes = [16, 128], strides = [1, 1]} : vector<16x384xf32> to vector<16x128xf32>
    %62 = vector.extract_strided_slice %52 {offsets = [0, 128], sizes = [16, 128], strides = [1, 1]} : vector<16x384xf32> to vector<16x128xf32>
    %63 = arith.addf %61, %62 : vector<16x128xf32>
    %64 = arith.negf %63 : vector<16x128xf32>
    %65 = math.exp %64 : vector<16x128xf32>
    %cst_26 = arith.constant 1.000000e+00 : f32
    %66 = vector.broadcast %cst_26 : f32 to vector<16x128xf32>
    %67 = arith.addf %66, %65 : vector<16x128xf32>
    %68 = arith.divf %66, %67 : vector<16x128xf32>
    %69 = vector.extract_strided_slice %47 {offsets = [0, 256], sizes = [16, 128], strides = [1, 1]} : vector<16x384xf32> to vector<16x128xf32>
    %70 = vector.extract_strided_slice %52 {offsets = [0, 256], sizes = [16, 128], strides = [1, 1]} : vector<16x384xf32> to vector<16x128xf32>
    %71 = arith.mulf %60, %70 : vector<16x128xf32>
    %72 = arith.addf %69, %71 : vector<16x128xf32>
    %73 = math.tanh %72 : vector<16x128xf32>
    %cst_27 = arith.constant 1.000000e+00 : f32
    %74 = vector.broadcast %cst_27 : f32 to vector<16x128xf32>
    %75 = arith.subf %74, %68 : vector<16x128xf32>
    %76 = arith.mulf %75, %73 : vector<16x128xf32>
    %77 = arith.mulf %68, %44 : vector<16x128xf32>
    %78 = arith.addf %76, %77 : vector<16x128xf32>
    %c2_i32 = arith.constant 2 : i32
    %79 = arith.index_cast %c2_i32 : i32 to index
    %c0_28 = arith.constant 0 : index
    %c0_29 = arith.constant 0 : index
    %80 = vector.load %arg9[%79, %c0_28, %c0_29] : memref<8x16x384xf32, #tpu.memory_space<vmem>>, vector<1x16x384xf32>
    %81 = vector.shape_cast %80 : vector<1x16x384xf32> to vector<16x384xf32>
    %82 = arith.truncf %78 : vector<16x128xf32> to vector<16x128xbf16>
    %c0_30 = arith.constant 0 : index
    %c0_31 = arith.constant 0 : index
    %83 = vector.load %arg3[%c0_30, %c0_31] : memref<128x384xbf16, #tpu.memory_space<vmem>>, vector<128x384xbf16>
    %cst_32 = arith.constant dense<0.000000e+00> : vector<16x384xf32>
    %84 = tpu.matmul %82, %83, %cst_32 {dimension_numbers = #tpu.dot_dimension_numbers<[1], [0], [0], [1], [0, 0, 1, 1], [], []>} : vector<16x128xbf16>, vector<128x384xbf16>, vector<16x384xf32> -> vector<16x384xf32>
    %85 = vector.broadcast %9 : vector<1x384xf32> to vector<16x384xf32>
    %86 = arith.addf %84, %85 : vector<16x384xf32>
    %87 = vector.extract_strided_slice %81 {offsets = [0, 0], sizes = [16, 128], strides = [1, 1]} : vector<16x384xf32> to vector<16x128xf32>
    %88 = vector.extract_strided_slice %86 {offsets = [0, 0], sizes = [16, 128], strides = [1, 1]} : vector<16x384xf32> to vector<16x128xf32>
    %89 = arith.addf %87, %88 : vector<16x128xf32>
    %90 = arith.negf %89 : vector<16x128xf32>
    %91 = math.exp %90 : vector<16x128xf32>
    %cst_33 = arith.constant 1.000000e+00 : f32
    %92 = vector.broadcast %cst_33 : f32 to vector<16x128xf32>
    %93 = arith.addf %92, %91 : vector<16x128xf32>
    %94 = arith.divf %92, %93 : vector<16x128xf32>
    %95 = vector.extract_strided_slice %81 {offsets = [0, 128], sizes = [16, 128], strides = [1, 1]} : vector<16x384xf32> to vector<16x128xf32>
    %96 = vector.extract_strided_slice %86 {offsets = [0, 128], sizes = [16, 128], strides = [1, 1]} : vector<16x384xf32> to vector<16x128xf32>
    %97 = arith.addf %95, %96 : vector<16x128xf32>
    %98 = arith.negf %97 : vector<16x128xf32>
    %99 = math.exp %98 : vector<16x128xf32>
    %cst_34 = arith.constant 1.000000e+00 : f32
    %100 = vector.broadcast %cst_34 : f32 to vector<16x128xf32>
    %101 = arith.addf %100, %99 : vector<16x128xf32>
    %102 = arith.divf %100, %101 : vector<16x128xf32>
    %103 = vector.extract_strided_slice %81 {offsets = [0, 256], sizes = [16, 128], strides = [1, 1]} : vector<16x384xf32> to vector<16x128xf32>
    %104 = vector.extract_strided_slice %86 {offsets = [0, 256], sizes = [16, 128], strides = [1, 1]} : vector<16x384xf32> to vector<16x128xf32>
    %105 = arith.mulf %94, %104 : vector<16x128xf32>
    %106 = arith.addf %103, %105 : vector<16x128xf32>
    %107 = math.tanh %106 : vector<16x128xf32>
    %cst_35 = arith.constant 1.000000e+00 : f32
    %108 = vector.broadcast %cst_35 : f32 to vector<16x128xf32>
    %109 = arith.subf %108, %102 : vector<16x128xf32>
    %110 = arith.mulf %109, %107 : vector<16x128xf32>
    %111 = arith.mulf %102, %78 : vector<16x128xf32>
    %112 = arith.addf %110, %111 : vector<16x128xf32>
    %c3_i32 = arith.constant 3 : i32
    %113 = arith.index_cast %c3_i32 : i32 to index
    %c0_36 = arith.constant 0 : index
    %c0_37 = arith.constant 0 : index
    %114 = vector.load %arg9[%113, %c0_36, %c0_37] : memref<8x16x384xf32, #tpu.memory_space<vmem>>, vector<1x16x384xf32>
    %115 = vector.shape_cast %114 : vector<1x16x384xf32> to vector<16x384xf32>
    %116 = arith.truncf %112 : vector<16x128xf32> to vector<16x128xbf16>
    %c0_38 = arith.constant 0 : index
    %c0_39 = arith.constant 0 : index
    %117 = vector.load %arg3[%c0_38, %c0_39] : memref<128x384xbf16, #tpu.memory_space<vmem>>, vector<128x384xbf16>
    %cst_40 = arith.constant dense<0.000000e+00> : vector<16x384xf32>
    %118 = tpu.matmul %116, %117, %cst_40 {dimension_numbers = #tpu.dot_dimension_numbers<[1], [0], [0], [1], [0, 0, 1, 1], [], []>} : vector<16x128xbf16>, vector<128x384xbf16>, vector<16x384xf32> -> vector<16x384xf32>
    %119 = vector.broadcast %9 : vector<1x384xf32> to vector<16x384xf32>
    %120 = arith.addf %118, %119 : vector<16x384xf32>
    %121 = vector.extract_strided_slice %115 {offsets = [0, 0], sizes = [16, 128], strides = [1, 1]} : vector<16x384xf32> to vector<16x128xf32>
    %122 = vector.extract_strided_slice %120 {offsets = [0, 0], sizes = [16, 128], strides = [1, 1]} : vector<16x384xf32> to vector<16x128xf32>
    %123 = arith.addf %121, %122 : vector<16x128xf32>
    %124 = arith.negf %123 : vector<16x128xf32>
    %125 = math.exp %124 : vector<16x128xf32>
    %cst_41 = arith.constant 1.000000e+00 : f32
    %126 = vector.broadcast %cst_41 : f32 to vector<16x128xf32>
    %127 = arith.addf %126, %125 : vector<16x128xf32>
    %128 = arith.divf %126, %127 : vector<16x128xf32>
    %129 = vector.extract_strided_slice %115 {offsets = [0, 128], sizes = [16, 128], strides = [1, 1]} : vector<16x384xf32> to vector<16x128xf32>
    %130 = vector.extract_strided_slice %120 {offsets = [0, 128], sizes = [16, 128], strides = [1, 1]} : vector<16x384xf32> to vector<16x128xf32>
    %131 = arith.addf %129, %130 : vector<16x128xf32>
    %132 = arith.negf %131 : vector<16x128xf32>
    %133 = math.exp %132 : vector<16x128xf32>
    %cst_42 = arith.constant 1.000000e+00 : f32
    %134 = vector.broadcast %cst_42 : f32 to vector<16x128xf32>
    %135 = arith.addf %134, %133 : vector<16x128xf32>
    %136 = arith.divf %134, %135 : vector<16x128xf32>
    %137 = vector.extract_strided_slice %115 {offsets = [0, 256], sizes = [16, 128], strides = [1, 1]} : vector<16x384xf32> to vector<16x128xf32>
    %138 = vector.extract_strided_slice %120 {offsets = [0, 256], sizes = [16, 128], strides = [1, 1]} : vector<16x384xf32> to vector<16x128xf32>
    %139 = arith.mulf %128, %138 : vector<16x128xf32>
    %140 = arith.addf %137, %139 : vector<16x128xf32>
    %141 = math.tanh %140 : vector<16x128xf32>
    %cst_43 = arith.constant 1.000000e+00 : f32
    %142 = vector.broadcast %cst_43 : f32 to vector<16x128xf32>
    %143 = arith.subf %142, %136 : vector<16x128xf32>
    %144 = arith.mulf %143, %141 : vector<16x128xf32>
    %145 = arith.mulf %136, %112 : vector<16x128xf32>
    %146 = arith.addf %144, %145 : vector<16x128xf32>
    %c4_i32 = arith.constant 4 : i32
    %147 = arith.index_cast %c4_i32 : i32 to index
    %c0_44 = arith.constant 0 : index
    %c0_45 = arith.constant 0 : index
    %148 = vector.load %arg9[%147, %c0_44, %c0_45] : memref<8x16x384xf32, #tpu.memory_space<vmem>>, vector<1x16x384xf32>
    %149 = vector.shape_cast %148 : vector<1x16x384xf32> to vector<16x384xf32>
    %150 = arith.truncf %146 : vector<16x128xf32> to vector<16x128xbf16>
    %c0_46 = arith.constant 0 : index
    %c0_47 = arith.constant 0 : index
    %151 = vector.load %arg3[%c0_46, %c0_47] : memref<128x384xbf16, #tpu.memory_space<vmem>>, vector<128x384xbf16>
    %cst_48 = arith.constant dense<0.000000e+00> : vector<16x384xf32>
    %152 = tpu.matmul %150, %151, %cst_48 {dimension_numbers = #tpu.dot_dimension_numbers<[1], [0], [0], [1], [0, 0, 1, 1], [], []>} : vector<16x128xbf16>, vector<128x384xbf16>, vector<16x384xf32> -> vector<16x384xf32>
    %153 = vector.broadcast %9 : vector<1x384xf32> to vector<16x384xf32>
    %154 = arith.addf %152, %153 : vector<16x384xf32>
    %155 = vector.extract_strided_slice %149 {offsets = [0, 0], sizes = [16, 128], strides = [1, 1]} : vector<16x384xf32> to vector<16x128xf32>
    %156 = vector.extract_strided_slice %154 {offsets = [0, 0], sizes = [16, 128], strides = [1, 1]} : vector<16x384xf32> to vector<16x128xf32>
    %157 = arith.addf %155, %156 : vector<16x128xf32>
    %158 = arith.negf %157 : vector<16x128xf32>
    %159 = math.exp %158 : vector<16x128xf32>
    %cst_49 = arith.constant 1.000000e+00 : f32
    %160 = vector.broadcast %cst_49 : f32 to vector<16x128xf32>
    %161 = arith.addf %160, %159 : vector<16x128xf32>
    %162 = arith.divf %160, %161 : vector<16x128xf32>
    %163 = vector.extract_strided_slice %149 {offsets = [0, 128], sizes = [16, 128], strides = [1, 1]} : vector<16x384xf32> to vector<16x128xf32>
    %164 = vector.extract_strided_slice %154 {offsets = [0, 128], sizes = [16, 128], strides = [1, 1]} : vector<16x384xf32> to vector<16x128xf32>
    %165 = arith.addf %163, %164 : vector<16x128xf32>
    %166 = arith.negf %165 : vector<16x128xf32>
    %167 = math.exp %166 : vector<16x128xf32>
    %cst_50 = arith.constant 1.000000e+00 : f32
    %168 = vector.broadcast %cst_50 : f32 to vector<16x128xf32>
    %169 = arith.addf %168, %167 : vector<16x128xf32>
    %170 = arith.divf %168, %169 : vector<16x128xf32>
    %171 = vector.extract_strided_slice %149 {offsets = [0, 256], sizes = [16, 128], strides = [1, 1]} : vector<16x384xf32> to vector<16x128xf32>
    %172 = vector.extract_strided_slice %154 {offsets = [0, 256], sizes = [16, 128], strides = [1, 1]} : vector<16x384xf32> to vector<16x128xf32>
    %173 = arith.mulf %162, %172 : vector<16x128xf32>
    %174 = arith.addf %171, %173 : vector<16x128xf32>
    %175 = math.tanh %174 : vector<16x128xf32>
    %cst_51 = arith.constant 1.000000e+00 : f32
    %176 = vector.broadcast %cst_51 : f32 to vector<16x128xf32>
    %177 = arith.subf %176, %170 : vector<16x128xf32>
    %178 = arith.mulf %177, %175 : vector<16x128xf32>
    %179 = arith.mulf %170, %146 : vector<16x128xf32>
    %180 = arith.addf %178, %179 : vector<16x128xf32>
    %c5_i32 = arith.constant 5 : i32
    %181 = arith.index_cast %c5_i32 : i32 to index
    %c0_52 = arith.constant 0 : index
    %c0_53 = arith.constant 0 : index
    %182 = vector.load %arg9[%181, %c0_52, %c0_53] : memref<8x16x384xf32, #tpu.memory_space<vmem>>, vector<1x16x384xf32>
    %183 = vector.shape_cast %182 : vector<1x16x384xf32> to vector<16x384xf32>
    %184 = arith.truncf %180 : vector<16x128xf32> to vector<16x128xbf16>
    %c0_54 = arith.constant 0 : index
    %c0_55 = arith.constant 0 : index
    %185 = vector.load %arg3[%c0_54, %c0_55] : memref<128x384xbf16, #tpu.memory_space<vmem>>, vector<128x384xbf16>
    %cst_56 = arith.constant dense<0.000000e+00> : vector<16x384xf32>
    %186 = tpu.matmul %184, %185, %cst_56 {dimension_numbers = #tpu.dot_dimension_numbers<[1], [0], [0], [1], [0, 0, 1, 1], [], []>} : vector<16x128xbf16>, vector<128x384xbf16>, vector<16x384xf32> -> vector<16x384xf32>
    %187 = vector.broadcast %9 : vector<1x384xf32> to vector<16x384xf32>
    %188 = arith.addf %186, %187 : vector<16x384xf32>
    %189 = vector.extract_strided_slice %183 {offsets = [0, 0], sizes = [16, 128], strides = [1, 1]} : vector<16x384xf32> to vector<16x128xf32>
    %190 = vector.extract_strided_slice %188 {offsets = [0, 0], sizes = [16, 128], strides = [1, 1]} : vector<16x384xf32> to vector<16x128xf32>
    %191 = arith.addf %189, %190 : vector<16x128xf32>
    %192 = arith.negf %191 : vector<16x128xf32>
    %193 = math.exp %192 : vector<16x128xf32>
    %cst_57 = arith.constant 1.000000e+00 : f32
    %194 = vector.broadcast %cst_57 : f32 to vector<16x128xf32>
    %195 = arith.addf %194, %193 : vector<16x128xf32>
    %196 = arith.divf %194, %195 : vector<16x128xf32>
    %197 = vector.extract_strided_slice %183 {offsets = [0, 128], sizes = [16, 128], strides = [1, 1]} : vector<16x384xf32> to vector<16x128xf32>
    %198 = vector.extract_strided_slice %188 {offsets = [0, 128], sizes = [16, 128], strides = [1, 1]} : vector<16x384xf32> to vector<16x128xf32>
    %199 = arith.addf %197, %198 : vector<16x128xf32>
    %200 = arith.negf %199 : vector<16x128xf32>
    %201 = math.exp %200 : vector<16x128xf32>
    %cst_58 = arith.constant 1.000000e+00 : f32
    %202 = vector.broadcast %cst_58 : f32 to vector<16x128xf32>
    %203 = arith.addf %202, %201 : vector<16x128xf32>
    %204 = arith.divf %202, %203 : vector<16x128xf32>
    %205 = vector.extract_strided_slice %183 {offsets = [0, 256], sizes = [16, 128], strides = [1, 1]} : vector<16x384xf32> to vector<16x128xf32>
    %206 = vector.extract_strided_slice %188 {offsets = [0, 256], sizes = [16, 128], strides = [1, 1]} : vector<16x384xf32> to vector<16x128xf32>
    %207 = arith.mulf %196, %206 : vector<16x128xf32>
    %208 = arith.addf %205, %207 : vector<16x128xf32>
    %209 = math.tanh %208 : vector<16x128xf32>
    %cst_59 = arith.constant 1.000000e+00 : f32
    %210 = vector.broadcast %cst_59 : f32 to vector<16x128xf32>
    %211 = arith.subf %210, %204 : vector<16x128xf32>
    %212 = arith.mulf %211, %209 : vector<16x128xf32>
    %213 = arith.mulf %204, %180 : vector<16x128xf32>
    %214 = arith.addf %212, %213 : vector<16x128xf32>
    %c6_i32 = arith.constant 6 : i32
    %215 = arith.index_cast %c6_i32 : i32 to index
    %c0_60 = arith.constant 0 : index
    %c0_61 = arith.constant 0 : index
    %216 = vector.load %arg9[%215, %c0_60, %c0_61] : memref<8x16x384xf32, #tpu.memory_space<vmem>>, vector<1x16x384xf32>
    %217 = vector.shape_cast %216 : vector<1x16x384xf32> to vector<16x384xf32>
    %218 = arith.truncf %214 : vector<16x128xf32> to vector<16x128xbf16>
    %c0_62 = arith.constant 0 : index
    %c0_63 = arith.constant 0 : index
    %219 = vector.load %arg3[%c0_62, %c0_63] : memref<128x384xbf16, #tpu.memory_space<vmem>>, vector<128x384xbf16>
    %cst_64 = arith.constant dense<0.000000e+00> : vector<16x384xf32>
    %220 = tpu.matmul %218, %219, %cst_64 {dimension_numbers = #tpu.dot_dimension_numbers<[1], [0], [0], [1], [0, 0, 1, 1], [], []>} : vector<16x128xbf16>, vector<128x384xbf16>, vector<16x384xf32> -> vector<16x384xf32>
    %221 = vector.broadcast %9 : vector<1x384xf32> to vector<16x384xf32>
    %222 = arith.addf %220, %221 : vector<16x384xf32>
    %223 = vector.extract_strided_slice %217 {offsets = [0, 0], sizes = [16, 128], strides = [1, 1]} : vector<16x384xf32> to vector<16x128xf32>
    %224 = vector.extract_strided_slice %222 {offsets = [0, 0], sizes = [16, 128], strides = [1, 1]} : vector<16x384xf32> to vector<16x128xf32>
    %225 = arith.addf %223, %224 : vector<16x128xf32>
    %226 = arith.negf %225 : vector<16x128xf32>
    %227 = math.exp %226 : vector<16x128xf32>
    %cst_65 = arith.constant 1.000000e+00 : f32
    %228 = vector.broadcast %cst_65 : f32 to vector<16x128xf32>
    %229 = arith.addf %228, %227 : vector<16x128xf32>
    %230 = arith.divf %228, %229 : vector<16x128xf32>
    %231 = vector.extract_strided_slice %217 {offsets = [0, 128], sizes = [16, 128], strides = [1, 1]} : vector<16x384xf32> to vector<16x128xf32>
    %232 = vector.extract_strided_slice %222 {offsets = [0, 128], sizes = [16, 128], strides = [1, 1]} : vector<16x384xf32> to vector<16x128xf32>
    %233 = arith.addf %231, %232 : vector<16x128xf32>
    %234 = arith.negf %233 : vector<16x128xf32>
    %235 = math.exp %234 : vector<16x128xf32>
    %cst_66 = arith.constant 1.000000e+00 : f32
    %236 = vector.broadcast %cst_66 : f32 to vector<16x128xf32>
    %237 = arith.addf %236, %235 : vector<16x128xf32>
    %238 = arith.divf %236, %237 : vector<16x128xf32>
    %239 = vector.extract_strided_slice %217 {offsets = [0, 256], sizes = [16, 128], strides = [1, 1]} : vector<16x384xf32> to vector<16x128xf32>
    %240 = vector.extract_strided_slice %222 {offsets = [0, 256], sizes = [16, 128], strides = [1, 1]} : vector<16x384xf32> to vector<16x128xf32>
    %241 = arith.mulf %230, %240 : vector<16x128xf32>
    %242 = arith.addf %239, %241 : vector<16x128xf32>
    %243 = math.tanh %242 : vector<16x128xf32>
    %cst_67 = arith.constant 1.000000e+00 : f32
    %244 = vector.broadcast %cst_67 : f32 to vector<16x128xf32>
    %245 = arith.subf %244, %238 : vector<16x128xf32>
    %246 = arith.mulf %245, %243 : vector<16x128xf32>
    %247 = arith.mulf %238, %214 : vector<16x128xf32>
    %248 = arith.addf %246, %247 : vector<16x128xf32>
    %c7_i32 = arith.constant 7 : i32
    %249 = arith.index_cast %c7_i32 : i32 to index
    %c0_68 = arith.constant 0 : index
    %c0_69 = arith.constant 0 : index
    %250 = vector.load %arg9[%249, %c0_68, %c0_69] : memref<8x16x384xf32, #tpu.memory_space<vmem>>, vector<1x16x384xf32>
    %251 = vector.shape_cast %250 : vector<1x16x384xf32> to vector<16x384xf32>
    %252 = arith.truncf %248 : vector<16x128xf32> to vector<16x128xbf16>
    %c0_70 = arith.constant 0 : index
    %c0_71 = arith.constant 0 : index
    %253 = vector.load %arg3[%c0_70, %c0_71] : memref<128x384xbf16, #tpu.memory_space<vmem>>, vector<128x384xbf16>
    %cst_72 = arith.constant dense<0.000000e+00> : vector<16x384xf32>
    %254 = tpu.matmul %252, %253, %cst_72 {dimension_numbers = #tpu.dot_dimension_numbers<[1], [0], [0], [1], [0, 0, 1, 1], [], []>} : vector<16x128xbf16>, vector<128x384xbf16>, vector<16x384xf32> -> vector<16x384xf32>
    %255 = vector.broadcast %9 : vector<1x384xf32> to vector<16x384xf32>
    %256 = arith.addf %254, %255 : vector<16x384xf32>
    %257 = vector.extract_strided_slice %251 {offsets = [0, 0], sizes = [16, 128], strides = [1, 1]} : vector<16x384xf32> to vector<16x128xf32>
    %258 = vector.extract_strided_slice %256 {offsets = [0, 0], sizes = [16, 128], strides = [1, 1]} : vector<16x384xf32> to vector<16x128xf32>
    %259 = arith.addf %257, %258 : vector<16x128xf32>
    %260 = arith.negf %259 : vector<16x128xf32>
    %261 = math.exp %260 : vector<16x128xf32>
    %cst_73 = arith.constant 1.000000e+00 : f32
    %262 = vector.broadcast %cst_73 : f32 to vector<16x128xf32>
    %263 = arith.addf %262, %261 : vector<16x128xf32>
    %264 = arith.divf %262, %263 : vector<16x128xf32>
    %265 = vector.extract_strided_slice %251 {offsets = [0, 128], sizes = [16, 128], strides = [1, 1]} : vector<16x384xf32> to vector<16x128xf32>
    %266 = vector.extract_strided_slice %256 {offsets = [0, 128], sizes = [16, 128], strides = [1, 1]} : vector<16x384xf32> to vector<16x128xf32>
    %267 = arith.addf %265, %266 : vector<16x128xf32>
    %268 = arith.negf %267 : vector<16x128xf32>
    %269 = math.exp %268 : vector<16x128xf32>
    %cst_74 = arith.constant 1.000000e+00 : f32
    %270 = vector.broadcast %cst_74 : f32 to vector<16x128xf32>
    %271 = arith.addf %270, %269 : vector<16x128xf32>
    %272 = arith.divf %270, %271 : vector<16x128xf32>
    %273 = vector.extract_strided_slice %251 {offsets = [0, 256], sizes = [16, 128], strides = [1, 1]} : vector<16x384xf32> to vector<16x128xf32>
    %274 = vector.extract_strided_slice %256 {offsets = [0, 256], sizes = [16, 128], strides = [1, 1]} : vector<16x384xf32> to vector<16x128xf32>
    %275 = arith.mulf %264, %274 : vector<16x128xf32>
    %276 = arith.addf %273, %275 : vector<16x128xf32>
    %277 = math.tanh %276 : vector<16x128xf32>
    %cst_75 = arith.constant 1.000000e+00 : f32
    %278 = vector.broadcast %cst_75 : f32 to vector<16x128xf32>
    %279 = arith.subf %278, %272 : vector<16x128xf32>
    %280 = arith.mulf %279, %277 : vector<16x128xf32>
    %281 = arith.mulf %272, %248 : vector<16x128xf32>
    %282 = arith.addf %280, %281 : vector<16x128xf32>
    %c8_i32 = arith.constant 8 : i32
    %cst_76 = arith.constant 0.000000e+00 : f32
    %283 = vector.broadcast %cst_76 : f32 to vector<16x128xf32>
    %284 = arith.maximumf %282, %283 : vector<16x128xf32>
    %285 = arith.truncf %284 : vector<16x128xf32> to vector<16x128xbf16>
    %c0_77 = arith.constant 0 : index
    %c0_78 = arith.constant 0 : index
    %286 = vector.load %arg6[%c0_77, %c0_78] : memref<128x128xbf16, #tpu.memory_space<vmem>>, vector<128x128xbf16>
    %cst_79 = arith.constant dense<0.000000e+00> : vector<16x128xf32>
    %287 = tpu.matmul %285, %286, %cst_79 {dimension_numbers = #tpu.dot_dimension_numbers<[1], [0], [0], [1], [0, 0, 1, 1], [], []>} : vector<16x128xbf16>, vector<128x128xbf16>, vector<16x128xf32> -> vector<16x128xf32>
    %c0_80 = arith.constant 0 : index
    %c0_81 = arith.constant 0 : index
    %288 = vector.load %arg7[%c0_80, %c0_81] : memref<1x128xf32, #tpu.memory_space<vmem>>, vector<1x128xf32>
    %289 = vector.broadcast %288 : vector<1x128xf32> to vector<16x128xf32>
    %290 = arith.addf %287, %289 : vector<16x128xf32>
    %c0_82 = arith.constant 0 : index
    %c0_83 = arith.constant 0 : index
    %291 = vector.load %arg8[%c0_82, %c0_83] : memref<16x128xf32, #tpu.memory_space<vmem>>, vector<16x128xf32>
    tpu.vector_store %arg8[%c0_82, %c0_83], %290 {strides = array<i32>} : memref<16x128xf32, #tpu.memory_space<vmem>>, vector<16x128xf32>,
    return
  }
  func.func @transform_0(%arg0: i32) -> (i32, i32, i32) {
    %c0_i32 = arith.constant 0 : i32
    %c0_i32_0 = arith.constant 0 : i32
    %c0_i32_1 = arith.constant 0 : i32
    return %c0_i32, %arg0, %c0_i32_0 : i32, i32, i32
  }
  func.func @transform_1(%arg0: i32) -> (i32, i32) {
    %c0_i32 = arith.constant 0 : i32
    %c0_i32_0 = arith.constant 0 : i32
    %c0_i32_1 = arith.constant 0 : i32
    return %c0_i32, %c0_i32_0 : i32, i32
  }
  func.func @transform_2(%arg0: i32) -> (i32, i32) {
    %c0_i32 = arith.constant 0 : i32
    %c0_i32_0 = arith.constant 0 : i32
    %c0_i32_1 = arith.constant 0 : i32
    return %c0_i32, %c0_i32_0 : i32, i32
  }
  func.func @transform_3(%arg0: i32) -> (i32, i32) {
    %c0_i32 = arith.constant 0 : i32
    %c0_i32_0 = arith.constant 0 : i32
    %c0_i32_1 = arith.constant 0 : i32
    return %c0_i32, %c0_i32_0 : i32, i32
  }
  func.func @transform_4(%arg0: i32) -> (i32, i32) {
    %c0_i32 = arith.constant 0 : i32
    %c0_i32_0 = arith.constant 0 : i32
    %c0_i32_1 = arith.constant 0 : i32
    return %c0_i32, %c0_i32_0 : i32, i32
  }
  func.func @transform_5(%arg0: i32) -> (i32, i32) {
    %c0_i32 = arith.constant 0 : i32
    %c0_i32_0 = arith.constant 0 : i32
    %c0_i32_1 = arith.constant 0 : i32
    return %c0_i32, %c0_i32_0 : i32, i32
  }
  func.func @transform_6(%arg0: i32) -> (i32, i32) {
    %c0_i32 = arith.constant 0 : i32
    %c0_i32_0 = arith.constant 0 : i32
    %c0_i32_1 = arith.constant 0 : i32
    return %c0_i32, %c0_i32_0 : i32, i32
  }
  func.func @transform_7(%arg0: i32) -> (i32, i32) {
    %c0_i32 = arith.constant 0 : i32
    %c0_i32_0 = arith.constant 0 : i32
    return %arg0, %c0_i32 : i32, i32
  }
}

</mosaic_0001>

<llo_original>
// kernel: tpu_custom_call.1
$region0: #{tpu_custom_call.1}
  #allocation0 [shape = 'u32[]', space=smem, size = 0x4, offset = 0x4, fixed_abs, tag = 'smem constant byte address 0x4 - core index']
  #allocation1 [shape = 'u32[144,128]{1,0:T(1,128)}', space=vmem, size = 0x12000, scoped, tag = 'internal scratch']
  #allocation2 [shape = 'f32[8,16,384]{2,1,0:T(8,128)}', space=vmem, size = 0x30000, scoped, tag = 'scratch operand']
  %s0 = inlined_call_operand.hbm [shape: bf16[8,16,128], index: 0, kind: input, shape index: {}]
  %s1 = inlined_call_operand.hbm [shape: bf16[128,384], index: 1, kind: input, shape index: {}]
  %s2 = inlined_call_operand.hbm [shape: bf16[128,384], index: 2, kind: input, shape index: {}]
  %s3 = inlined_call_operand.vmem [shape: f32[1,384], index: 3, kind: input, shape index: {}]
  %s4 = inlined_call_operand.vmem [shape: f32[1,384], index: 4, kind: input, shape index: {}]
  %s5 = inlined_call_operand.hbm [shape: bf16[128,128], index: 5, kind: input, shape index: {}]
  %s6 = inlined_call_operand.vmem [shape: f32[1,128], index: 6, kind: input, shape index: {}]
  %s7 = inlined_call_operand.hbm [shape: f32[16,128], index: 7, kind: output, shape index: {}]
  %s8 = sld [smem:[#allocation0]]
  $region54: #{tpu_custom_call.1} parent=0
    _
  %s10 = ssub.s32 1, %s8
  %s11 = scalar_select 0, %s10, %s8
  $region1: #{tpu_custom_call.1} parent=0
    #allocation3 [shape = 'u8[32768]{0}', space=vmem, size = 0x8000, scoped, tag = 'input window, operand 0, single buffered']
    #allocation4 [shape = 's32[1]{0}', space=sflag, size = 0x4, scoped, tag = 'scoped memory for tpu_custom_call.1']
    #allocation5 [shape = 's32[1]{0}', space=sflag, size = 0x4, scoped, tag = 'scoped memory for tpu_custom_call.1']
    #allocation6 [shape = 'u8[98304]{0}', space=vmem, size = 0x18000, scoped, tag = 'input window, operand 1, single buffered']
    #allocation7 [shape = 's32[1]{0}', space=sflag, size = 0x4, scoped, tag = 'scoped memory for tpu_custom_call.1']
    #allocation8 [shape = 'u8[98304]{0}', space=vmem, size = 0x18000, scoped, tag = 'input window, operand 2, single buffered']
    #allocation9 [shape = 'u8[32768]{0}', space=vmem, size = 0x8000, scoped, tag = 'input window, operand 5, single buffered']
    #allocation10 [shape = 's32[1]{0}', space=sflag, size = 0x4, scoped, tag = 'scoped memory for tpu_custom_call.1']
    #allocation11 [shape = 'u8[8192]{0}', space=vmem, size = 0x2000, scoped, tag = 'output window, operand 0, single buffered']
    %12 = vsyncpa [#allocation4], 0
    %13 = vsyncpa [#allocation7], 0
    %14 = vsyncpa [#allocation10], 0
    %15 = vsyncpa [#allocation5], 0
    // Predicated region
    $region2: #{tpu_custom_call.1} parent=1 // pred_check
      _
    $region3: #{tpu_custom_call.1} parent=1 // pred_check_branch
      %17 = sbr.rel (0) target = $region5
    $region4: #{tpu_custom_call.1} parent=1 // pred_region
      %s19 = ssub.s32 1024, 1024
      %20 = vsyncadd [#allocation4], %s19
      %s21 = sshll.u32 [#allocation3], 4
      %s22 = int_to_ptr.vmem [resolvable:$true] %s21
      %27 = dma.hbm_to_vmem [thread:$0]  %s0, 1024, %s22, [#allocation4], 64, 64, 4
    $region5: #{tpu_custom_call.1} parent=1 // pred_fallthru
      _
    // Predicated region
    $region6: #{tpu_custom_call.1} parent=1 // pred_check
      _
    $region7: #{tpu_custom_call.1} parent=1 // pred_check_branch
      %29 = sbr.rel (0) target = $region9
    $region8: #{tpu_custom_call.1} parent=1 // pred_region
      %s31 = ssub.s32 3072, 3072
      %32 = vsyncadd [#allocation7], %s31
      %s33 = sshll.u32 [#allocation6], 4
      %s34 = int_to_ptr.vmem [resolvable:$true] %s33
      %39 = dma.hbm_to_vmem [thread:$0]  %s1, 3072, %s34, [#allocation7], 192, 192, 12
    $region9: #{tpu_custom_call.1} parent=1 // pred_fallthru
      _
    // Predicated region
    $region10: #{tpu_custom_call.1} parent=1 // pred_check
      _
    $region11: #{tpu_custom_call.1} parent=1 // pred_check_branch
      %41 = sbr.rel (0) target = $region13
    $region12: #{tpu_custom_call.1} parent=1 // pred_region
      %s43 = ssub.s32 3072, 3072
      %44 = vsyncadd [#allocation7], %s43
      %s45 = sshll.u32 [#allocation8], 4
      %s46 = int_to_ptr.vmem [resolvable:$true] %s45
      %51 = dma.hbm_to_vmem [thread:$0]  %s2, 3072, %s46, [#allocation7], 192, 192, 12
    $region13: #{tpu_custom_call.1} parent=1 // pred_fallthru
      _
    // Predicated region
    $region14: #{tpu_custom_call.1} parent=1 // pred_check
      _
    $region15: #{tpu_custom_call.1} parent=1 // pred_check_branch
      %53 = sbr.rel (0) target = $region17
    $region16: #{tpu_custom_call.1} parent=1 // pred_region
      _
    $region17: #{tpu_custom_call.1} parent=1 // pred_fallthru
      _
    // Predicated region
    $region18: #{tpu_custom_call.1} parent=1 // pred_check
      _
    $region19: #{tpu_custom_call.1} parent=1 // pred_check_branch
      %55 = sbr.rel (0) target = $region21
    $region20: #{tpu_custom_call.1} parent=1 // pred_region
      _
    $region21: #{tpu_custom_call.1} parent=1 // pred_fallthru
      _
    // Predicated region
    $region22: #{tpu_custom_call.1} parent=1 // pred_check
      _
    $region23: #{tpu_custom_call.1} parent=1 // pred_check_branch
      %57 = sbr.rel (0) target = $region25
    $region24: #{tpu_custom_call.1} parent=1 // pred_region
      %s59 = ssub.s32 1024, 1024
      %60 = vsyncadd [#allocation10], %s59
      %s61 = sshll.u32 [#allocation9], 4
      %s62 = int_to_ptr.vmem [resolvable:$true] %s61
      %67 = dma.hbm_to_vmem [thread:$0]  %s5, 1024, %s62, [#allocation10], 64, 64, 4
    $region25: #{tpu_custom_call.1} parent=1 // pred_fallthru
      _
    // Predicated region
    $region26: #{tpu_custom_call.1} parent=1 // pred_check
      _
    $region27: #{tpu_custom_call.1} parent=1 // pred_check_branch
      %69 = sbr.rel (0) target = $region29
    $region28: #{tpu_custom_call.1} parent=1 // pred_region
      _
    $region29: #{tpu_custom_call.1} parent=1 // pred_fallthru
      _
    // Predicated region
    $region30: #{tpu_custom_call.1} parent=1 // pred_check
      _
    $region31: #{tpu_custom_call.1} parent=1 // pred_check_branch
      %71 = sbr.rel (0) target = $region33
    $region32: #{tpu_custom_call.1} parent=1 // pred_region
      %72 = dma.done [#allocation4], 1024
    $region33: #{tpu_custom_call.1} parent=1 // pred_fallthru
      _
    // Predicated region
    $region34: #{tpu_custom_call.1} parent=1 // pred_check
      _
    $region35: #{tpu_custom_call.1} parent=1 // pred_check_branch
      %74 = sbr.rel (0) target = $region37
    $region36: #{tpu_custom_call.1} parent=1 // pred_region
      %75 = dma.done [#allocation7], 3072
    $region37: #{tpu_custom_call.1} parent=1 // pred_fallthru
      _
    // Predicated region
    $region38: #{tpu_custom_call.1} parent=1 // pred_check
      _
    $region39: #{tpu_custom_call.1} parent=1 // pred_check_branch
      %77 = sbr.rel (0) target = $region41
    $region40: #{tpu_custom_call.1} parent=1 // pred_region
      %78 = dma.done [#allocation7], 3072
    $region41: #{tpu_custom_call.1} parent=1 // pred_fallthru
      _
    // Predicated region
    $region42: #{tpu_custom_call.1} parent=1 // pred_check
      _
    $region43: #{tpu_custom_call.1} parent=1 // pred_check_branch
      %80 = sbr.rel (0) target = $region45
    $region44: #{tpu_custom_call.1} parent=1 // pred_region
      %81 = dma.done [#allocation10], 1024
    $region45: #{tpu_custom_call.1} parent=1 // pred_fallthru
      _
    %v83 = vld [vmem:[#allocation3] sm:$0xf]
    %v84 = vld [vmem:[#allocation3 + $0x4] sm:$0xf]
    %v85 = vld [vmem:[#allocation3 + $0x8] sm:$0xf]
    %v86 = vld [vmem:[#allocation3 + $0xc] sm:$0xf]
    %v87 = vld [vmem:[#allocation3 + $0x10] sm:$0xf]
    %v88 = vld [vmem:[#allocation3 + $0x14] sm:$0xf]
    %v89 = vld [vmem:[#allocation3 + $0x18] sm:$0xf]
    %v90 = vld [vmem:[#allocation3 + $0x1c] sm:$0xf]
    %v91 = vld [vmem:[#allocation3 + $0x20] sm:$0xf]
    %v92 = vld [vmem:[#allocation3 + $0x24] sm:$0xf]
    %v93 = vld [vmem:[#allocation3 + $0x28] sm:$0xf]
    %v94 = vld [vmem:[#allocation3 + $0x2c] sm:$0xf]
    %v95 = vld [vmem:[#allocation3 + $0x30] sm:$0xf]
    %v96 = vld [vmem:[#allocation3 + $0x34] sm:$0xf]
    %v97 = vld [vmem:[#allocation3 + $0x38] sm:$0xf]
    %v98 = vld [vmem:[#allocation3 + $0x3c] sm:$0xf]
    %v99 = vld [vmem:[#allocation6] sm:$0xff]
    %v100 = vld [vmem:[#allocation6 + $0x8] sm:$0xf]
    %v101 = vld [vmem:[#allocation6 + $0xc] sm:$0xff]
    %v102 = vld [vmem:[#allocation6 + $0x14] sm:$0xf]
    %v103 = vld [vmem:[#allocation6 + $0x18] sm:$0xff]
    %v104 = vld [vmem:[#allocation6 + $0x20] sm:$0xf]
    %v105 = vld [vmem:[#allocation6 + $0x24] sm:$0xff]
    %v106 = vld [vmem:[#allocation6 + $0x2c] sm:$0xf]
    %v107 = vld [vmem:[#allocation6 + $0x30] sm:$0xff]
    %v108 = vld [vmem:[#allocation6 + $0x38] sm:$0xf]
    %v109 = vld [vmem:[#allocation6 + $0x3c] sm:$0xff]
    %v110 = vld [vmem:[#allocation6 + $0x44] sm:$0xf]
    %v111 = vld [vmem:[#allocation6 + $0x48] sm:$0xff]
    %v112 = vld [vmem:[#allocation6 + $0x50] sm:$0xf]
    %v113 = vld [vmem:[#allocation6 + $0x54] sm:$0xff]
    %v114 = vld [vmem:[#allocation6 + $0x5c] sm:$0xf]
    %v115 = vld [vmem:[#allocation6 + $0x60] sm:$0xff]
    %v116 = vld [vmem:[#allocation6 + $0x68] sm:$0xf]
    %v117 = vld [vmem:[#allocation6 + $0x6c] sm:$0xff]
    %v118 = vld [vmem:[#allocation6 + $0x74] sm:$0xf]
    %v119 = vld [vmem:[#allocation6 + $0x78] sm:$0xff]
    %v120 = vld [vmem:[#allocation6 + $0x80] sm:$0xf]
    %v121 = vld [vmem:[#allocation6 + $0x84] sm:$0xff]
    %v122 = vld [vmem:[#allocation6 + $0x8c] sm:$0xf]
    %v123 = vld [vmem:[#allocation6 + $0x90] sm:$0xff]
    %v124 = vld [vmem:[#allocation6 + $0x98] sm:$0xf]
    %v125 = vld [vmem:[#allocation6 + $0x9c] sm:$0xff]
    %v126 = vld [vmem:[#allocation6 + $0xa4] sm:$0xf]
    %v127 = vld [vmem:[#allocation6 + $0xa8] sm:$0xff]
    %v128 = vld [vmem:[#allocation6 + $0xb0] sm:$0xf]
    %v129 = vld [vmem:[#allocation6 + $0xb4] sm:$0xff]
    %v130 = vld [vmem:[#allocation6 + $0xbc] sm:$0xf]
    %v131 = vld [vmem:[%s3] sm:$0x7]
    %v133 = vlaneseq
    %v134 = vshrl.u32 %v133, 7
    %v135 = vsub.s32 0, %v134
    %v136 = vrot.slane %v131, %v135
    %v137 = vlaneseq
    %v138 = vshrl.u32 %v137, 7
    %v139 = vsub.s32 1, %v138
    %v140 = vrot.slane %v131, %v139
    %v141 = vlaneseq
    %v142 = vshrl.u32 %v141, 7
    %v143 = vsub.s32 2, %v142
    %v144 = vrot.slane %v131, %v143
    %v164 = vunpack.c.l.b16 %v83
    %v165 = vunpack.c.l.b16 %v84
    %v166 = vunpack.c.l.b16 %v85
    %v167 = vunpack.c.l.b16 %v86
    %v168 = vunpack.c.l.b16 %v87
    %v169 = vunpack.c.l.b16 %v88
    %v170 = vunpack.c.l.b16 %v89
    %v171 = vunpack.c.l.b16 %v90
    %v172 = vunpack.c.l.b16 %v91
    %v173 = vunpack.c.l.b16 %v92
    %v174 = vunpack.c.l.b16 %v93
    %v175 = vunpack.c.l.b16 %v94
    %v176 = vunpack.c.l.b16 %v95
    %v177 = vunpack.c.l.b16 %v96
    %v178 = vunpack.c.l.b16 %v97
    %v179 = vunpack.c.l.b16 %v98
    %v180 = vpack.c.b16 %v165, %v164
    %v181 = vpack.c.b16 %v167, %v166
    %v182 = vpack.c.b16 %v169, %v168
    %v183 = vpack.c.b16 %v171, %v170
    %v184 = vpack.c.b16 %v173, %v172
    %v185 = vpack.c.b16 %v175, %v174
    %v186 = vpack.c.b16 %v177, %v176
    %v187 = vpack.c.b16 %v179, %v178
    %v228 = vunpack.c.l.b16 %v99
    %v229 = vunpack.c.h.b16 %v99
    %v230 = vunpack.c.l.b16 %v100
    %v231 = vunpack.c.l.b16 %v101
    %v232 = vunpack.c.h.b16 %v101
    %v233 = vunpack.c.l.b16 %v102
    %v234 = vunpack.c.l.b16 %v103
    %v235 = vunpack.c.h.b16 %v103
    %v236 = vunpack.c.l.b16 %v104
    %v237 = vunpack.c.l.b16 %v105
    %v238 = vunpack.c.h.b16 %v105
    %v239 = vunpack.c.l.b16 %v106
    %v240 = vunpack.c.l.b16 %v107
    %v241 = vunpack.c.h.b16 %v107
    %v242 = vunpack.c.l.b16 %v108
    %v243 = vunpack.c.l.b16 %v109
    %v244 = vunpack.c.h.b16 %v109
    %v245 = vunpack.c.l.b16 %v110
    %v246 = vunpack.c.l.b16 %v111
    %v247 = vunpack.c.h.b16 %v111
    %v248 = vunpack.c.l.b16 %v112
    %v249 = vunpack.c.l.b16 %v113
    %v250 = vunpack.c.h.b16 %v113
    %v251 = vunpack.c.l.b16 %v114
    %v252 = vunpack.c.l.b16 %v115
    %v253 = vunpack.c.h.b16 %v115
    %v254 = vunpack.c.l.b16 %v116
    %v255 = vunpack.c.l.b16 %v117
    %v256 = vunpack.c.h.b16 %v117
    %v257 = vunpack.c.l.b16 %v118
    %v258 = vunpack.c.l.b16 %v119
    %v259 = vunpack.c.h.b16 %v119
    %v260 = vunpack.c.l.b16 %v120
    %v261 = vunpack.c.l.b16 %v121
    %v262 = vunpack.c.h.b16 %v121
    %v263 = vunpack.c.l.b16 %v122
    %v264 = vunpack.c.l.b16 %v123
    %v265 = vunpack.c.h.b16 %v123
    %v266 = vunpack.c.l.b16 %v124
    %v267 = vunpack.c.l.b16 %v125
    %v268 = vunpack.c.h.b16 %v125
    %v269 = vunpack.c.l.b16 %v126
    %v270 = vunpack.c.l.b16 %v127
    %v271 = vunpack.c.h.b16 %v127
    %v272 = vunpack.c.l.b16 %v128
    %v273 = vunpack.c.l.b16 %v129
    %v274 = vunpack.c.h.b16 %v129
    %v275 = vunpack.c.l.b16 %v130
    %v276 = vpack.c.b16 %v231, %v228
    %v277 = vpack.c.b16 %v232, %v229
    %v278 = vpack.c.b16 %v233, %v230
    %v279 = vpack.c.b16 %v237, %v234
    %v280 = vpack.c.b16 %v238, %v235
    %v281 = vpack.c.b16 %v239, %v236
    %v282 = vpack.c.b16 %v243, %v240
    %v283 = vpack.c.b16 %v244, %v241
    %v284 = vpack.c.b16 %v245, %v242
    %v285 = vpack.c.b16 %v249, %v246
    %v286 = vpack.c.b16 %v250, %v247
    %v287 = vpack.c.b16 %v251, %v248
    %v288 = vpack.c.b16 %v255, %v252
    %v289 = vpack.c.b16 %v256, %v253
    %v290 = vpack.c.b16 %v257, %v254
    %v291 = vpack.c.b16 %v261, %v258
    %v292 = vpack.c.b16 %v262, %v259
    %v293 = vpack.c.b16 %v263, %v260
    %v294 = vpack.c.b16 %v267, %v264
    %v295 = vpack.c.b16 %v268, %v265
    %v296 = vpack.c.b16 %v269, %v266
    %v297 = vpack.c.b16 %v273, %v270
    %v298 = vpack.c.b16 %v274, %v271
    %v299 = vpack.c.b16 %v275, %v272
    %324 = vmatprep.subr.bf16.mxu0 %v277
    %325 = vmatpush1.bf16.msra.mxu0 %v276
    %326 = vmatprep.subr.bf16.mxu0 %v280
    %327 = vmatpush1.bf16.msra.mxu0 %v279
    %328 = vmatprep.subr.bf16.mxu0 %v283
    %329 = vmatpush1.bf16.msra.mxu0 %v282
    %330 = vmatprep.subr.bf16.mxu0 %v286
    %331 = vmatpush1.bf16.msra.mxu0 %v285
    %332 = vmatprep.subr.bf16.mxu0 %v289
    %333 = vmatpush1.bf16.msra.mxu0 %v288
    %334 = vmatprep.subr.bf16.mxu0 %v292
    %335 = vmatpush1.bf16.msra.mxu0 %v291
    %336 = vmatprep.subr.bf16.mxu0 %v295
    %337 = vmatpush1.bf16.msra.mxu0 %v294
    %338 = vmatprep.subr.bf16.mxu0 %v298
    %339 = vmatpush1.bf16.msra.mxu0 %v297
    %340 = vmatprep.subr.bf16.mxu0 0
    %341 = vmatpush1.bf16.msra.mxu0 0
    %342 = vmatprep.subr.bf16.mxu0 0
    %343 = vmatpush1.bf16.msra.mxu0 0
    %344 = vmatprep.subr.bf16.mxu0 0
    %345 = vmatpush1.bf16.msra.mxu0 0
    %346 = vmatprep.subr.bf16.mxu0 0
    %347 = vmatpush1.bf16.msra.mxu0 0
    %348 = vmatprep.subr.bf16.mxu0 0
    %349 = vmatpush1.bf16.msra.mxu0 0
    %350 = vmatprep.subr.bf16.mxu0 0
    %351 = vmatpush1.bf16.msra.mxu0 0
    %352 = vmatprep.subr.bf16.mxu0 0
    %353 = vmatpush1.bf16.msra.mxu0 0
    %354 = vmatprep.subr.bf16.mxu0 0
    %355 = vmatpush1.bf16.msra.mxu0 0
    %356 = vmatprep.mubr.bf16.mxu0 0
    %357 = vmatmul.mubr.bf16.gmra.mrb[0].mxu0 %v180
    %v358 = vpop.f32.mrb[0].mxu0
    %v359 = vadd.f32 %v136, %v358
    %v360 = vpop.f32.mrb[0].mxu0
    %v361 = vadd.f32 %v140, %v360
    %v362 = vpop.f32.mrb[0].mxu0
    %v363 = vadd.f32 %v136, %v362
    %v364 = vpop.f32.mrb[0].mxu0
    %v365 = vadd.f32 %v140, %v364
    %366 = vmatprep.mubr.bf16.mxu0 0
    %367 = vmatmul.mubr.bf16.gmra.mrb[0].mxu0 %v181
    %v368 = vpop.f32.mrb[0].mxu0
    %v369 = vadd.f32 %v136, %v368
    %v370 = vpop.f32.mrb[0].mxu0
    %v371 = vadd.f32 %v140, %v370
    %v372 = vpop.f32.mrb[0].mxu0
    %v373 = vadd.f32 %v136, %v372
    %v374 = vpop.f32.mrb[0].mxu0
    %v375 = vadd.f32 %v140, %v374
    %376 = vmatprep.mubr.bf16.mxu0 0
    %377 = vmatmul.mubr.bf16.gmra.mrb[0].mxu0 %v182
    %v378 = vpop.f32.mrb[0].mxu0
    %v379 = vadd.f32 %v136, %v378
    %v380 = vpop.f32.mrb[0].mxu0
    %v381 = vadd.f32 %v140, %v380
    %v382 = vpop.f32.mrb[0].mxu0
    %v383 = vadd.f32 %v136, %v382
    %v384 = vpop.f32.mrb[0].mxu0
    %v385 = vadd.f32 %v140, %v384
    %386 = vmatprep.mubr.bf16.mxu0 0
    %387 = vmatmul.mubr.bf16.gmra.mrb[0].mxu0 %v183
    %v388 = vpop.f32.mrb[0].mxu0
    %v389 = vadd.f32 %v136, %v388
    %v390 = vpop.f32.mrb[0].mxu0
    %v391 = vadd.f32 %v140, %v390
    %v392 = vpop.f32.mrb[0].mxu0
    %v393 = vadd.f32 %v136, %v392
    %v394 = vpop.f32.mrb[0].mxu0
    %v395 = vadd.f32 %v140, %v394
    %396 = vmatprep.mubr.bf16.mxu0 0
    %397 = vmatmul.mubr.bf16.gmra.mrb[0].mxu0 %v184
    %v398 = vpop.f32.mrb[0].mxu0
    %v399 = vadd.f32 %v136, %v398
    %v400 = vpop.f32.mrb[0].mxu0
    %v401 = vadd.f32 %v140, %v400
    %v402 = vpop.f32.mrb[0].mxu0
    %v403 = vadd.f32 %v136, %v402
    %v404 = vpop.f32.mrb[0].mxu0
    %v405 = vadd.f32 %v140, %v404
    %406 = vmatprep.mubr.bf16.mxu0 0
    %407 = vmatmul.mubr.bf16.gmra.mrb[0].mxu0 %v185
    %v408 = vpop.f32.mrb[0].mxu0
    %v409 = vadd.f32 %v136, %v408
    %v410 = vpop.f32.mrb[0].mxu0
    %v411 = vadd.f32 %v140, %v410
    %v412 = vpop.f32.mrb[0].mxu0
    %v413 = vadd.f32 %v136, %v412
    %v414 = vpop.f32.mrb[0].mxu0
    %v415 = vadd.f32 %v140, %v414
    %416 = vmatprep.mubr.bf16.mxu0 0
    %417 = vmatmul.mubr.bf16.gmra.mrb[0].mxu0 %v186
    %v418 = vpop.f32.mrb[0].mxu0
    %v419 = vadd.f32 %v136, %v418
    %v420 = vpop.f32.mrb[0].mxu0
    %v421 = vadd.f32 %v140, %v420
    %v422 = vpop.f32.mrb[0].mxu0
    %v423 = vadd.f32 %v136, %v422
    %v424 = vpop.f32.mrb[0].mxu0
    %v425 = vadd.f32 %v140, %v424
    %426 = vmatprep.mubr.bf16.mxu0 0
    %427 = vmatmul.mubr.bf16.gmra.mrb[0].mxu0 %v187
    %v428 = vpop.f32.mrb[0].mxu0
    %v429 = vadd.f32 %v136, %v428
    %v430 = vpop.f32.mrb[0].mxu0
    %v431 = vadd.f32 %v140, %v430
    %v432 = vpop.f32.mrb[0].mxu0
    %v433 = vadd.f32 %v136, %v432
    %v434 = vpop.f32.mrb[0].mxu0
    %v435 = vadd.f32 %v140, %v434
    %436 = vdwg.mxu0
    %437 = vmatprep.subr.bf16.mxu0 0
    %438 = vmatpush1.bf16.msra.mxu0 %v278
    %439 = vmatprep.subr.bf16.mxu0 0
    %440 = vmatpush1.bf16.msra.mxu0 %v281
    %441 = vmatprep.subr.bf16.mxu0 0
    %442 = vmatpush1.bf16.msra.mxu0 %v284
    %443 = vmatprep.subr.bf16.mxu0 0
    %444 = vmatpush1.bf16.msra.mxu0 %v287
    %445 = vmatprep.subr.bf16.mxu0 0
    %446 = vmatpush1.bf16.msra.mxu0 %v290
    %447 = vmatprep.subr.bf16.mxu0 0
    %448 = vmatpush1.bf16.msra.mxu0 %v293
    %449 = vmatprep.subr.bf16.mxu0 0
    %450 = vmatpush1.bf16.msra.mxu0 %v296
    %451 = vmatprep.subr.bf16.mxu0 0
    %452 = vmatpush1.bf16.msra.mxu0 %v299
    %453 = vmatprep.subr.bf16.mxu0 0
    %454 = vmatpush1.bf16.msra.mxu0 0
    %455 = vmatprep.subr.bf16.mxu0 0
    %456 = vmatpush1.bf16.msra.mxu0 0
    %457 = vmatprep.subr.bf16.mxu0 0
    %458 = vmatpush1.bf16.msra.mxu0 0
    %459 = vmatprep.subr.bf16.mxu0 0
    %460 = vmatpush1.bf16.msra.mxu0 0
    %461 = vmatprep.subr.bf16.mxu0 0
    %462 = vmatpush1.bf16.msra.mxu0 0
    %463 = vmatprep.subr.bf16.mxu0 0
    %464 = vmatpush1.bf16.msra.mxu0 0
    %465 = vmatprep.subr.bf16.mxu0 0
    %466 = vmatpush1.bf16.msra.mxu0 0
    %467 = vmatprep.subr.bf16.mxu0 0
    %468 = vmatpush1.bf16.msra.mxu0 0
    %469 = vmatprep.mubr.bf16.mxu0 0
    %470 = vmatmul.mubr.bf16.gmra.mrb[0].mxu0 %v180
    %v471 = vpop.f32.mrb[0].mxu0
    %v472 = vadd.f32 %v144, %v471
    %v473 = vpop.f32.mrb[0].mxu0
    %v474 = vpop.f32.mrb[0].mxu0
    %v475 = vadd.f32 %v144, %v474
    %v476 = vpop.f32.mrb[0].mxu0
    %477 = vmatprep.mubr.bf16.mxu0 0
    %478 = vmatmul.mubr.bf16.gmra.mrb[0].mxu0 %v181
    %v479 = vpop.f32.mrb[0].mxu0
    %v480 = vadd.f32 %v144, %v479
    %v481 = vpop.f32.mrb[0].mxu0
    %v482 = vpop.f32.mrb[0].mxu0
    %v483 = vadd.f32 %v144, %v482
    %v484 = vpop.f32.mrb[0].mxu0
    %485 = vmatprep.mubr.bf16.mxu0 0
    %486 = vmatmul.mubr.bf16.gmra.mrb[0].mxu0 %v182
    %v487 = vpop.f32.mrb[0].mxu0
    %v488 = vadd.f32 %v144, %v487
    %v489 = vpop.f32.mrb[0].mxu0
    %v490 = vpop.f32.mrb[0].mxu0
    %v491 = vadd.f32 %v144, %v490
    %v492 = vpop.f32.mrb[0].mxu0
    %493 = vmatprep.mubr.bf16.mxu0 0
    %494 = vmatmul.mubr.bf16.gmra.mrb[0].mxu0 %v183
    %v495 = vpop.f32.mrb[0].mxu0
    %v496 = vadd.f32 %v144, %v495
    %v497 = vpop.f32.mrb[0].mxu0
    %v498 = vpop.f32.mrb[0].mxu0
    %v499 = vadd.f32 %v144, %v498
    %v500 = vpop.f32.mrb[0].mxu0
    %501 = vmatprep.mubr.bf16.mxu0 0
    %502 = vmatmul.mubr.bf16.gmra.mrb[0].mxu0 %v184
    %v503 = vpop.f32.mrb[0].mxu0
    %v504 = vadd.f32 %v144, %v503
    %v505 = vpop.f32.mrb[0].mxu0
    %v506 = vpop.f32.mrb[0].mxu0
    %v507 = vadd.f32 %v144, %v506
    %v508 = vpop.f32.mrb[0].mxu0
    %509 = vmatprep.mubr.bf16.mxu0 0
    %510 = vmatmul.mubr.bf16.gmra.mrb[0].mxu0 %v185
    %v511 = vpop.f32.mrb[0].mxu0
    %v512 = vadd.f32 %v144, %v511
    %v513 = vpop.f32.mrb[0].mxu0
    %v514 = vpop.f32.mrb[0].mxu0
    %v515 = vadd.f32 %v144, %v514
    %v516 = vpop.f32.mrb[0].mxu0
    %517 = vmatprep.mubr.bf16.mxu0 0
    %518 = vmatmul.mubr.bf16.gmra.mrb[0].mxu0 %v186
    %v519 = vpop.f32.mrb[0].mxu0
    %v520 = vadd.f32 %v144, %v519
    %v521 = vpop.f32.mrb[0].mxu0
    %v522 = vpop.f32.mrb[0].mxu0
    %v523 = vadd.f32 %v144, %v522
    %v524 = vpop.f32.mrb[0].mxu0
    %525 = vmatprep.mubr.bf16.mxu0 0
    %526 = vmatmul.mubr.bf16.gmra.mrb[0].mxu0 %v187
    %v527 = vpop.f32.mrb[0].mxu0
    %v528 = vadd.f32 %v144, %v527
    %v529 = vpop.f32.mrb[0].mxu0
    %v530 = vpop.f32.mrb[0].mxu0
    %v531 = vadd.f32 %v144, %v530
    %v532 = vpop.f32.mrb[0].mxu0
    %533 = vdwg.mxu0
    %534 = vst [vmem:[#allocation2] sm:$0xff] %v359
    %535 = vst [vmem:[#allocation2 + $0x8] sm:$0xff] %v361
    %536 = vst [vmem:[#allocation2 + $0x10] sm:$0xff] %v472
    %537 = vst [vmem:[#allocation2 + $0x18] sm:$0xff] %v363
    %538 = vst [vmem:[#allocation2 + $0x20] sm:$0xff] %v365
    %539 = vst [vmem:[#allocation2 + $0x28] sm:$0xff] %v475
    %540 = vst [vmem:[#allocation2 + $0x30] sm:$0xff] %v369
    %541 = vst [vmem:[#allocation2 + $0x38] sm:$0xff] %v371
    %542 = vst [vmem:[#allocation2 + $0x40] sm:$0xff] %v480
    %543 = vst [vmem:[#allocation2 + $0x48] sm:$0xff] %v373
    %544 = vst [vmem:[#allocation2 + $0x50] sm:$0xff] %v375
    %545 = vst [vmem:[#allocation2 + $0x58] sm:$0xff] %v483
    %546 = vst [vmem:[#allocation2 + $0x60] sm:$0xff] %v379
    %547 = vst [vmem:[#allocation2 + $0x68] sm:$0xff] %v381
    %548 = vst [vmem:[#allocation2 + $0x70] sm:$0xff] %v488
    %549 = vst [vmem:[#allocation2 + $0x78] sm:$0xff] %v383
    %550 = vst [vmem:[#allocation2 + $0x80] sm:$0xff] %v385
    %551 = vst [vmem:[#allocation2 + $0x88] sm:$0xff] %v491
    %552 = vst [vmem:[#allocation2 + $0x90] sm:$0xff] %v389
    %553 = vst [vmem:[#allocation2 + $0x98] sm:$0xff] %v391
    %554 = vst [vmem:[#allocation2 + $0xa0] sm:$0xff] %v496
    %555 = vst [vmem:[#allocation2 + $0xa8] sm:$0xff] %v393
    %556 = vst [vmem:[#allocation2 + $0xb0] sm:$0xff] %v395
    %557 = vst [vmem:[#allocation2 + $0xb8] sm:$0xff] %v499
    %558 = vst [vmem:[#allocation2 + $0xc0] sm:$0xff] %v399
    %559 = vst [vmem:[#allocation2 + $0xc8] sm:$0xff] %v401
    %560 = vst [vmem:[#allocation2 + $0xd0] sm:$0xff] %v504
    %561 = vst [vmem:[#allocation2 + $0xd8] sm:$0xff] %v403
    %562 = vst [vmem:[#allocation2 + $0xe0] sm:$0xff] %v405
    %563 = vst [vmem:[#allocation2 + $0xe8] sm:$0xff] %v507
    %564 = vst [vmem:[#allocation2 + $0xf0] sm:$0xff] %v409
    %565 = vst [vmem:[#allocation2 + $0xf8] sm:$0xff] %v411
    %566 = vst [vmem:[#allocation2 + $0x100] sm:$0xff] %v512
    %567 = vst [vmem:[#allocation2 + $0x108] sm:$0xff] %v413
    %568 = vst [vmem:[#allocation2 + $0x110] sm:$0xff] %v415
    %569 = vst [vmem:[#allocation2 + $0x118] sm:$0xff] %v515
    %570 = vst [vmem:[#allocation2 + $0x120] sm:$0xff] %v419
    %571 = vst [vmem:[#allocation2 + $0x128] sm:$0xff] %v421
    %572 = vst [vmem:[#allocation2 + $0x130] sm:$0xff] %v520
    %573 = vst [vmem:[#allocation2 + $0x138] sm:$0xff] %v423
    %574 = vst [vmem:[#allocation2 + $0x140] sm:$0xff] %v425
    %575 = vst [vmem:[#allocation2 + $0x148] sm:$0xff] %v523
    %576 = vst [vmem:[#allocation2 + $0x150] sm:$0xff] %v429
    %577 = vst [vmem:[#allocation2 + $0x158] sm:$0xff] %v431
    %578 = vst [vmem:[#allocation2 + $0x160] sm:$0xff] %v528
    %579 = vst [vmem:[#allocation2 + $0x168] sm:$0xff] %v433
    %580 = vst [vmem:[#allocation2 + $0x170] sm:$0xff] %v435
    %581 = vst [vmem:[#allocation2 + $0x178] sm:$0xff] %v531
    %v582 = vld [vmem:[%s4] sm:$0x7]
    %v583 = vld [vmem:[#allocation2] sm:$0xff]
    %v584 = vld [vmem:[#allocation2 + $0x8] sm:$0xff]
    %v585 = vld [vmem:[#allocation2 + $0x10] sm:$0xff]
    %v586 = vld [vmem:[#allocation2 + $0x18] sm:$0xff]
    %v587 = vld [vmem:[#allocation2 + $0x20] sm:$0xff]
    %v588 = vld [vmem:[#allocation2 + $0x28] sm:$0xff]
    %v589 = vld [vmem:[#allocation8] sm:$0xff]
    %v590 = vld [vmem:[#allocation8 + $0x8] sm:$0xf]
    %v591 = vld [vmem:[#allocation8 + $0xc] sm:$0xff]
    %v592 = vld [vmem:[#allocation8 + $0x14] sm:$0xf]
    %v593 = vld [vmem:[#allocation8 + $0x18] sm:$0xff]
    %v594 = vld [vmem:[#allocation8 + $0x20] sm:$0xf]
    %v595 = vld [vmem:[#allocation8 + $0x24] sm:$0xff]
    %v596 = vld [vmem:[#allocation8 + $0x2c] sm:$0xf]
    %v597 = vld [vmem:[#allocation8 + $0x30] sm:$0xff]
    %v598 = vld [vmem:[#allocation8 + $0x38] sm:$0xf]
    %v599 = vld [vmem:[#allocation8 + $0x3c] sm:$0xff]
    %v600 = vld [vmem:[#allocation8 + $0x44] sm:$0xf]
    %v601 = vld [vmem:[#allocation8 + $0x48] sm:$0xff]
    %v602 = vld [vmem:[#allocation8 + $0x50] sm:$0xf]
    %v603 = vld [vmem:[#allocation8 + $0x54] sm:$0xff]
    %v604 = vld [vmem:[#allocation8 + $0x5c] sm:$0xf]
    %v605 = vld [vmem:[#allocation8 + $0x60] sm:$0xff]
    %v606 = vld [vmem:[#allocation8 + $0x68] sm:$0xf]
    %v607 = vld [vmem:[#allocation8 + $0x6c] sm:$0xff]
    %v608 = vld [vmem:[#allocation8 + $0x74] sm:$0xf]
    %v609 = vld [vmem:[#allocation8 + $0x78] sm:$0xff]
    %v610 = vld [vmem:[#allocation8 + $0x80] sm:$0xf]
    %v611 = vld [vmem:[#allocation8 + $0x84] sm:$0xff]
    %v612 = vld [vmem:[#allocation8 + $0x8c] sm:$0xf]
    %v613 = vld [vmem:[#allocation8 + $0x90] sm:$0xff]
    %v614 = vld [vmem:[#allocation8 + $0x98] sm:$0xf]
    %v615 = vld [vmem:[#allocation8 + $0x9c] sm:$0xff]
    %v616 = vld [vmem:[#allocation8 + $0xa4] sm:$0xf]
    %v617 = vld [vmem:[#allocation8 + $0xa8] sm:$0xff]
    %v618 = vld [vmem:[#allocation8 + $0xb0] sm:$0xf]
    %v619 = vld [vmem:[#allocation8 + $0xb4] sm:$0xff]
    %v620 = vld [vmem:[#allocation8 + $0xbc] sm:$0xf]
    %v622 = vlaneseq
    %v623 = vshrl.u32 %v622, 7
    %v624 = vsub.s32 0, %v623
    %v625 = vrot.slane %v582, %v624
    %v626 = vlaneseq
    %v627 = vshrl.u32 %v626, 7
    %v628 = vsub.s32 1, %v627
    %v629 = vrot.slane %v582, %v628
    %v630 = vlaneseq
    %v631 = vshrl.u32 %v630, 7
    %v632 = vsub.s32 2, %v631
    %v633 = vrot.slane %v582, %v632
    %v669 = vunpack.c.l.b16 %v589
    %v670 = vunpack.c.h.b16 %v589
    %v671 = vunpack.c.l.b16 %v590
    %v672 = vunpack.c.l.b16 %v591
    %v673 = vunpack.c.h.b16 %v591
    %v674 = vunpack.c.l.b16 %v592
    %v675 = vunpack.c.l.b16 %v593
    %v676 = vunpack.c.h.b16 %v593
    %v677 = vunpack.c.l.b16 %v594
    %v678 = vunpack.c.l.b16 %v595
    %v679 = vunpack.c.h.b16 %v595
    %v680 = vunpack.c.l.b16 %v596
    %v681 = vunpack.c.l.b16 %v597
    %v682 = vunpack.c.h.b16 %v597
    %v683 = vunpack.c.l.b16 %v598
    %v684 = vunpack.c.l.b16 %v599
    %v685 = vunpack.c.h.b16 %v599
    %v686 = vunpack.c.l.b16 %v600
    %v687 = vunpack.c.l.b16 %v601
    %v688 = vunpack.c.h.b16 %v601
    %v689 = vunpack.c.l.b16 %v602
    %v690 = vunpack.c.l.b16 %v603
    %v691 = vunpack.c.h.b16 %v603
    %v692 = vunpack.c.l.b16 %v604
    %v693 = vunpack.c.l.b16 %v605
    %v694 = vunpack.c.h.b16 %v605
    %v695 = vunpack.c.l.b16 %v606
    %v696 = vunpack.c.l.b16 %v607
    %v697 = vunpack.c.h.b16 %v607
    %v698 = vunpack.c.l.b16 %v608
    %v699 = vunpack.c.l.b16 %v609
    %v700 = vunpack.c.h.b16 %v609
    %v701 = vunpack.c.l.b16 %v610
    %v702 = vunpack.c.l.b16 %v611
    %v703 = vunpack.c.h.b16 %v611
    %v704 = vunpack.c.l.b16 %v612
    %v705 = vunpack.c.l.b16 %v613
    %v706 = vunpack.c.h.b16 %v613
    %v707 = vunpack.c.l.b16 %v614
    %v708 = vunpack.c.l.b16 %v615
    %v709 = vunpack.c.h.b16 %v615
    %v710 = vunpack.c.l.b16 %v616
    %v711 = vunpack.c.l.b16 %v617
    %v712 = vunpack.c.h.b16 %v617
    %v713 = vunpack.c.l.b16 %v618
    %v714 = vunpack.c.l.b16 %v619
    %v715 = vunpack.c.h.b16 %v619
    %v716 = vunpack.c.l.b16 %v620
    %v717 = vpack.c.b16 %v672, %v669
    %v718 = vpack.c.b16 %v673, %v670
    %v719 = vpack.c.b16 %v674, %v671
    %v720 = vpack.c.b16 %v678, %v675
    %v721 = vpack.c.b16 %v679, %v676
    %v722 = vpack.c.b16 %v680, %v677
    %v723 = vpack.c.b16 %v684, %v681
    %v724 = vpack.c.b16 %v685, %v682
    %v725 = vpack.c.b16 %v686, %v683
    %v726 = vpack.c.b16 %v690, %v687
    %v727 = vpack.c.b16 %v691, %v688
    %v728 = vpack.c.b16 %v692, %v689
    %v729 = vpack.c.b16 %v696, %v693
    %v730 = vpack.c.b16 %v697, %v694
    %v731 = vpack.c.b16 %v698, %v695
    %v732 = vpack.c.b16 %v702, %v699
    %v733 = vpack.c.b16 %v703, %v700
    %v734 = vpack.c.b16 %v704, %v701
    %v735 = vpack.c.b16 %v708, %v705
    %v736 = vpack.c.b16 %v709, %v706
    %v737 = vpack.c.b16 %v710, %v707
    %v738 = vpack.c.b16 %v714, %v711
    %v739 = vpack.c.b16 %v715, %v712
    %v740 = vpack.c.b16 %v716, %v713
    %765 = vmatprep.subr.bf16.mxu0 %v718
    %766 = vmatpush1.bf16.msra.mxu0 %v717
    %767 = vmatprep.subr.bf16.mxu0 %v721
    %768 = vmatpush1.bf16.msra.mxu0 %v720
    %769 = vmatprep.subr.bf16.mxu0 %v724
    %770 = vmatpush1.bf16.msra.mxu0 %v723
    %771 = vmatprep.subr.bf16.mxu0 %v727
    %772 = vmatpush1.bf16.msra.mxu0 %v726
    %773 = vmatprep.subr.bf16.mxu0 %v730
    %774 = vmatpush1.bf16.msra.mxu0 %v729
    %775 = vmatprep.subr.bf16.mxu0 %v733
    %776 = vmatpush1.bf16.msra.mxu0 %v732
    %777 = vmatprep.subr.bf16.mxu0 %v736
    %778 = vmatpush1.bf16.msra.mxu0 %v735
    %779 = vmatprep.subr.bf16.mxu0 %v739
    %780 = vmatpush1.bf16.msra.mxu0 %v738
    %781 = vmatprep.subr.bf16.mxu0 0
    %782 = vmatpush1.bf16.msra.mxu0 0
    %783 = vmatprep.subr.bf16.mxu0 0
    %784 = vmatpush1.bf16.msra.mxu0 0
    %785 = vmatprep.subr.bf16.mxu0 0
    %786 = vmatpush1.bf16.msra.mxu0 0
    %787 = vmatprep.subr.bf16.mxu0 0
    %788 = vmatpush1.bf16.msra.mxu0 0
    %789 = vmatprep.subr.bf16.mxu0 0
    %790 = vmatpush1.bf16.msra.mxu0 0
    %791 = vmatprep.subr.bf16.mxu0 0
    %792 = vmatpush1.bf16.msra.mxu0 0
    %793 = vmatprep.subr.bf16.mxu0 0
    %794 = vmatpush1.bf16.msra.mxu0 0
    %795 = vmatprep.subr.bf16.mxu0 0
    %796 = vmatpush1.bf16.msra.mxu0 0
    %797 = vmatprep.mubr.bf16.mxu0 0
    %798 = vmatmul.mubr.bf16.gmra.mrb[0].mxu0 0
    %v799 = vpop.f32.mrb[0].mxu0
    %v800 = vadd.f32 %v625, %v799
    %v801 = vpop.f32.mrb[0].mxu0
    %v802 = vadd.f32 %v629, %v801
    %v803 = vpop.f32.mrb[0].mxu0
    %v804 = vadd.f32 %v625, %v803
    %v805 = vpop.f32.mrb[0].mxu0
    %v806 = vadd.f32 %v629, %v805
    %807 = vdwg.mxu0
    %808 = vmatprep.subr.bf16.mxu0 0
    %809 = vmatpush1.bf16.msra.mxu0 %v719
    %810 = vmatprep.subr.bf16.mxu0 0
    %811 = vmatpush1.bf16.msra.mxu0 %v722
    %812 = vmatprep.subr.bf16.mxu0 0
    %813 = vmatpush1.bf16.msra.mxu0 %v725
    %814 = vmatprep.subr.bf16.mxu0 0
    %815 = vmatpush1.bf16.msra.mxu0 %v728
    %816 = vmatprep.subr.bf16.mxu0 0
    %817 = vmatpush1.bf16.msra.mxu0 %v731
    %818 = vmatprep.subr.bf16.mxu0 0
    %819 = vmatpush1.bf16.msra.mxu0 %v734
    %820 = vmatprep.subr.bf16.mxu0 0
    %821 = vmatpush1.bf16.msra.mxu0 %v737
    %822 = vmatprep.subr.bf16.mxu0 0
    %823 = vmatpush1.bf16.msra.mxu0 %v740
    %824 = vmatprep.subr.bf16.mxu0 0
    %825 = vmatpush1.bf16.msra.mxu0 0
    %826 = vmatprep.subr.bf16.mxu0 0
    %827 = vmatpush1.bf16.msra.mxu0 0
    %828 = vmatprep.subr.bf16.mxu0 0
    %829 = vmatpush1.bf16.msra.mxu0 0
    %830 = vmatprep.subr.bf16.mxu0 0
    %831 = vmatpush1.bf16.msra.mxu0 0
    %832 = vmatprep.subr.bf16.mxu0 0
    %833 = vmatpush1.bf16.msra.mxu0 0
    %834 = vmatprep.subr.bf16.mxu0 0
    %835 = vmatpush1.bf16.msra.mxu0 0
    %836 = vmatprep.subr.bf16.mxu0 0
    %837 = vmatpush1.bf16.msra.mxu0 0
    %838 = vmatprep.subr.bf16.mxu0 0
    %839 = vmatpush1.bf16.msra.mxu0 0
    %840 = vmatprep.mubr.bf16.mxu0 0
    %841 = vmatmul.mubr.bf16.gmra.mrb[0].mxu0 0
    %v842 = vpop.f32.mrb[0].mxu0
    %v843 = vadd.f32 %v633, %v842
    %v844 = vpop.f32.mrb[0].mxu0
    %v845 = vpop.f32.mrb[0].mxu0
    %v846 = vadd.f32 %v633, %v845
    %v847 = vpop.f32.mrb[0].mxu0
    %848 = vdwg.mxu0
    %v849 = vadd.f32 %v583, %v800
    %v850 = vadd.f32 %v586, %v804
    %v851 = vxor.u32 %v849, 2147483648
    %v852 = vxor.u32 %v850, 2147483648
    %v853 = vmul.f32 %v851, 1.442695
    %v854 = vpow.pop %v853
    %v855 = vmul.f32 %v852, 1.442695
    %v856 = vpow.pop %v855
    %v857 = vadd.f32 %v854, 1.0
    %v858 = vadd.f32 %v856, 1.0
    %v859 = vrcp.pop %v857
    %v860 = vmul.f32 1.0, %v859
    %v861 = vrcp.pop %v858
    %v862 = vmul.f32 1.0, %v861
    %v863 = vadd.f32 %v584, %v802
    %v864 = vadd.f32 %v587, %v806
    %v865 = vxor.u32 %v863, 2147483648
    %v866 = vxor.u32 %v864, 2147483648
    %v867 = vmul.f32 %v865, 1.442695
    %v868 = vpow.pop %v867
    %v869 = vmul.f32 %v866, 1.442695
    %v870 = vpow.pop %v869
    %v871 = vadd.f32 %v868, 1.0
    %v872 = vadd.f32 %v870, 1.0
    %v873 = vrcp.pop %v871
    %v874 = vmul.f32 1.0, %v873
    %v875 = vrcp.pop %v872
    %v876 = vmul.f32 1.0, %v875
    %v877 = vmul.f32 %v860, %v843
    %v878 = vmul.f32 %v862, %v846
    %v879 = vadd.f32 %v585, %v877
    %v880 = vadd.f32 %v588, %v878
    %v881 = vtanh.pop %v879
    %v882 = vtanh.pop %v880
    %v883 = vsub.f32 1.0, %v874
    %v884 = vsub.f32 1.0, %v876
    %v885 = vmul.f32 %v883, %v881
    %v886 = vmul.f32 %v884, %v882
    %v887 = vmul.f32 %v874, 0.0
    %v888 = vmul.f32 %v876, 0.0
    %v889 = vadd.f32 %v885, %v887
    %v890 = vadd.f32 %v886, %v888
    %s891 = scalar_lea.vmem [#allocation2], 48
    %v892 = vld [vmem:[%s891] sm:$0xff]
    %v893 = vld [vmem:[%s891 + $0x8] sm:$0xff]
    %v894 = vld [vmem:[%s891 + $0x10] sm:$0xff]
    %v895 = vld [vmem:[%s891 + $0x18] sm:$0xff]
    %v896 = vld [vmem:[%s891 + $0x20] sm:$0xff]
    %v897 = vld [vmem:[%s891 + $0x28] sm:$0xff]
    %v898 = vpack.c.bf16 %v890, %v889
    %899 = vmatprep.subr.bf16.mxu0 %v718
    %900 = vmatpush1.bf16.msra.mxu0 %v717
    %901 = vmatprep.subr.bf16.mxu0 %v721
    %902 = vmatpush1.bf16.msra.mxu0 %v720
    %903 = vmatprep.subr.bf16.mxu0 %v724
    %904 = vmatpush1.bf16.msra.mxu0 %v723
    %905 = vmatprep.subr.bf16.mxu0 %v727
    %906 = vmatpush1.bf16.msra.mxu0 %v726
    %907 = vmatprep.subr.bf16.mxu0 %v730
    %908 = vmatpush1.bf16.msra.mxu0 %v729
    %909 = vmatprep.subr.bf16.mxu0 %v733
    %910 = vmatpush1.bf16.msra.mxu0 %v732
    %911 = vmatprep.subr.bf16.mxu0 %v736
    %912 = vmatpush1.bf16.msra.mxu0 %v735
    %913 = vmatprep.subr.bf16.mxu0 %v739
    %914 = vmatpush1.bf16.msra.mxu0 %v738
    %915 = vmatprep.subr.bf16.mxu0 0
    %916 = vmatpush1.bf16.msra.mxu0 0
    %917 = vmatprep.subr.bf16.mxu0 0
    %918 = vmatpush1.bf16.msra.mxu0 0
    %919 = vmatprep.subr.bf16.mxu0 0
    %920 = vmatpush1.bf16.msra.mxu0 0
    %921 = vmatprep.subr.bf16.mxu0 0
    %922 = vmatpush1.bf16.msra.mxu0 0
    %923 = vmatprep.subr.bf16.mxu0 0
    %924 = vmatpush1.bf16.msra.mxu0 0
    %925 = vmatprep.subr.bf16.mxu0 0
    %926 = vmatpush1.bf16.msra.mxu0 0
    %927 = vmatprep.subr.bf16.mxu0 0
    %928 = vmatpush1.bf16.msra.mxu0 0
    %929 = vmatprep.subr.bf16.mxu0 0
    %930 = vmatpush1.bf16.msra.mxu0 0
    %931 = vmatprep.mubr.bf16.mxu0 0
    %932 = vmatmul.mubr.bf16.gmra.mrb[0].mxu0 %v898
    %v933 = vpop.f32.mrb[0].mxu0
    %v934 = vadd.f32 %v625, %v933
    %v935 = vpop.f32.mrb[0].mxu0
    %v936 = vadd.f32 %v629, %v935
    %v937 = vpop.f32.mrb[0].mxu0
    %v938 = vadd.f32 %v625, %v937
    %v939 = vpop.f32.mrb[0].mxu0
    %v940 = vadd.f32 %v629, %v939
    %941 = vdwg.mxu0
    %942 = vmatprep.subr.bf16.mxu0 0
    %943 = vmatpush1.bf16.msra.mxu0 %v719
    %944 = vmatprep.subr.bf16.mxu0 0
    %945 = vmatpush1.bf16.msra.mxu0 %v722
    %946 = vmatprep.subr.bf16.mxu0 0
    %947 = vmatpush1.bf16.msra.mxu0 %v725
    %948 = vmatprep.subr.bf16.mxu0 0
    %949 = vmatpush1.bf16.msra.mxu0 %v728
    %950 = vmatprep.subr.bf16.mxu0 0
    %951 = vmatpush1.bf16.msra.mxu0 %v731
    %952 = vmatprep.subr.bf16.mxu0 0
    %953 = vmatpush1.bf16.msra.mxu0 %v734
    %954 = vmatprep.subr.bf16.mxu0 0
    %955 = vmatpush1.bf16.msra.mxu0 %v737
    %956 = vmatprep.subr.bf16.mxu0 0
    %957 = vmatpush1.bf16.msra.mxu0 %v740
    %958 = vmatprep.subr.bf16.mxu0 0
    %959 = vmatpush1.bf16.msra.mxu0 0
    %960 = vmatprep.subr.bf16.mxu0 0
    %961 = vmatpush1.bf16.msra.mxu0 0
    %962 = vmatprep.subr.bf16.mxu0 0
    %963 = vmatpush1.bf16.msra.mxu0 0
    %964 = vmatprep.subr.bf16.mxu0 0
    %965 = vmatpush1.bf16.msra.mxu0 0
    %966 = vmatprep.subr.bf16.mxu0 0
    %967 = vmatpush1.bf16.msra.mxu0 0
    %968 = vmatprep.subr.bf16.mxu0 0
    %969 = vmatpush1.bf16.msra.mxu0 0
    %970 = vmatprep.subr.bf16.mxu0 0
    %971 = vmatpush1.bf16.msra.mxu0 0
    %972 = vmatprep.subr.bf16.mxu0 0
    %973 = vmatpush1.bf16.msra.mxu0 0
    %974 = vmatprep.mubr.bf16.mxu0 0
    %975 = vmatmul.mubr.bf16.gmra.mrb[0].mxu0 %v898
    %v976 = vpop.f32.mrb[0].mxu0
    %v977 = vadd.f32 %v633, %v976
    %v978 = vpop.f32.mrb[0].mxu0
    %v979 = vpop.f32.mrb[0].mxu0
    %v980 = vadd.f32 %v633, %v979
    %v981 = vpop.f32.mrb[0].mxu0
    %982 = vdwg.mxu0
    %v983 = vadd.f32 %v892, %v934
    %v984 = vadd.f32 %v895, %v938
    %v985 = vxor.u32 %v983, 2147483648
    %v986 = vxor.u32 %v984, 2147483648
    %v987 = vmul.f32 %v985, 1.442695
    %v988 = vpow.pop %v987
    %v989 = vmul.f32 %v986, 1.442695
    %v990 = vpow.pop %v989
    %v991 = vadd.f32 %v988, 1.0
    %v992 = vadd.f32 %v990, 1.0
    %v993 = vrcp.pop %v991
    %v994 = vmul.f32 1.0, %v993
    %v995 = vrcp.pop %v992
    %v996 = vmul.f32 1.0, %v995
    %v997 = vadd.f32 %v893, %v936
    %v998 = vadd.f32 %v896, %v940
    %v999 = vxor.u32 %v997, 2147483648
    %v1000 = vxor.u32 %v998, 2147483648
    %v1001 = vmul.f32 %v999, 1.442695
    %v1002 = vpow.pop %v1001
    %v1003 = vmul.f32 %v1000, 1.442695
    %v1004 = vpow.pop %v1003
    %v1005 = vadd.f32 %v1002, 1.0
    %v1006 = vadd.f32 %v1004, 1.0
    %v1007 = vrcp.pop %v1005
    %v1008 = vmul.f32 1.0, %v1007
    %v1009 = vrcp.pop %v1006
    %v1010 = vmul.f32 1.0, %v1009
    %v1011 = vmul.f32 %v994, %v977
    %v1012 = vmul.f32 %v996, %v980
    %v1013 = vadd.f32 %v894, %v1011
    %v1014 = vadd.f32 %v897, %v1012
    %v1015 = vtanh.pop %v1013
    %v1016 = vtanh.pop %v1014
    %v1017 = vsub.f32 1.0, %v1008
    %v1018 = vsub.f32 1.0, %v1010
    %v1019 = vmul.f32 %v1017, %v1015
    %v1020 = vmul.f32 %v1018, %v1016
    %v1021 = vmul.f32 %v1008, %v889
    %v1022 = vmul.f32 %v1010, %v890
    %v1023 = vadd.f32 %v1019, %v1021
    %v1024 = vadd.f32 %v1020, %v1022
    %s1025 = scalar_lea.vmem [#allocation2], 96
    %v1026 = vld [vmem:[%s1025] sm:$0xff]
    %v1027 = vld [vmem:[%s1025 + $0x8] sm:$0xff]
    %v1028 = vld [vmem:[%s1025 + $0x10] sm:$0xff]
    %v1029 = vld [vmem:[%s1025 + $0x18] sm:$0xff]
    %v1030 = vld [vmem:[%s1025 + $0x20] sm:$0xff]
    %v1031 = vld [vmem:[%s1025 + $0x28] sm:$0xff]
    %v1032 = vpack.c.bf16 %v1024, %v1023
    %1033 = vmatprep.subr.bf16.mxu0 %v718
    %1034 = vmatpush1.bf16.msra.mxu0 %v717
    %1035 = vmatprep.subr.bf16.mxu0 %v721
    %1036 = vmatpush1.bf16.msra.mxu0 %v720
    %1037 = vmatprep.subr.bf16.mxu0 %v724
    %1038 = vmatpush1.bf16.msra.mxu0 %v723
    %1039 = vmatprep.subr.bf16.mxu0 %v727
    %1040 = vmatpush1.bf16.msra.mxu0 %v726
    %1041 = vmatprep.subr.bf16.mxu0 %v730
    %1042 = vmatpush1.bf16.msra.mxu0 %v729
    %1043 = vmatprep.subr.bf16.mxu0 %v733
    %1044 = vmatpush1.bf16.msra.mxu0 %v732
    %1045 = vmatprep.subr.bf16.mxu0 %v736
    %1046 = vmatpush1.bf16.msra.mxu0 %v735
    %1047 = vmatprep.subr.bf16.mxu0 %v739
    %1048 = vmatpush1.bf16.msra.mxu0 %v738
    %1049 = vmatprep.subr.bf16.mxu0 0
    %1050 = vmatpush1.bf16.msra.mxu0 0
    %1051 = vmatprep.subr.bf16.mxu0 0
    %1052 = vmatpush1.bf16.msra.mxu0 0
    %1053 = vmatprep.subr.bf16.mxu0 0
    %1054 = vmatpush1.bf16.msra.mxu0 0
    %1055 = vmatprep.subr.bf16.mxu0 0
    %1056 = vmatpush1.bf16.msra.mxu0 0
    %1057 = vmatprep.subr.bf16.mxu0 0
    %1058 = vmatpush1.bf16.msra.mxu0 0
    %1059 = vmatprep.subr.bf16.mxu0 0
    %1060 = vmatpush1.bf16.msra.mxu0 0
    %1061 = vmatprep.subr.bf16.mxu0 0
    %1062 = vmatpush1.bf16.msra.mxu0 0
    %1063 = vmatprep.subr.bf16.mxu0 0
    %1064 = vmatpush1.bf16.msra.mxu0 0
    %1065 = vmatprep.mubr.bf16.mxu0 0
    %1066 = vmatmul.mubr.bf16.gmra.mrb[0].mxu0 %v1032
    %v1067 = vpop.f32.mrb[0].mxu0
    %v1068 = vadd.f32 %v625, %v1067
    %v1069 = vpop.f32.mrb[0].mxu0
    %v1070 = vadd.f32 %v629, %v1069
    %v1071 = vpop.f32.mrb[0].mxu0
    %v1072 = vadd.f32 %v625, %v1071
    %v1073 = vpop.f32.mrb[0].mxu0
    %v1074 = vadd.f32 %v629, %v1073
    %1075 = vdwg.mxu0
    %1076 = vmatprep.subr.bf16.mxu0 0
    %1077 = vmatpush1.bf16.msra.mxu0 %v719
    %1078 = vmatprep.subr.bf16.mxu0 0
    %1079 = vmatpush1.bf16.msra.mxu0 %v722
    %1080 = vmatprep.subr.bf16.mxu0 0
    %1081 = vmatpush1.bf16.msra.mxu0 %v725
    %1082 = vmatprep.subr.bf16.mxu0 0
    %1083 = vmatpush1.bf16.msra.mxu0 %v728
    %1084 = vmatprep.subr.bf16.mxu0 0
    %1085 = vmatpush1.bf16.msra.mxu0 %v731
    %1086 = vmatprep.subr.bf16.mxu0 0
    %1087 = vmatpush1.bf16.msra.mxu0 %v734
    %1088 = vmatprep.subr.bf16.mxu0 0
    %1089 = vmatpush1.bf16.msra.mxu0 %v737
    %1090 = vmatprep.subr.bf16.mxu0 0
    %1091 = vmatpush1.bf16.msra.mxu0 %v740
    %1092 = vmatprep.subr.bf16.mxu0 0
    %1093 = vmatpush1.bf16.msra.mxu0 0
    %1094 = vmatprep.subr.bf16.mxu0 0
    %1095 = vmatpush1.bf16.msra.mxu0 0
    %1096 = vmatprep.subr.bf16.mxu0 0
    %1097 = vmatpush1.bf16.msra.mxu0 0
    %1098 = vmatprep.subr.bf16.mxu0 0
    %1099 = vmatpush1.bf16.msra.mxu0 0
    %1100 = vmatprep.subr.bf16.mxu0 0
    %1101 = vmatpush1.bf16.msra.mxu0 0
    %1102 = vmatprep.subr.bf16.mxu0 0
    %1103 = vmatpush1.bf16.msra.mxu0 0
    %1104 = vmatprep.subr.bf16.mxu0 0
    %1105 = vmatpush1.bf16.msra.mxu0 0
    %1106 = vmatprep.subr.bf16.mxu0 0
    %1107 = vmatpush1.bf16.msra.mxu0 0
    %1108 = vmatprep.mubr.bf16.mxu0 0
    %1109 = vmatmul.mubr.bf16.gmra.mrb[0].mxu0 %v1032
    %v1110 = vpop.f32.mrb[0].mxu0
    %v1111 = vadd.f32 %v633, %v1110
    %v1112 = vpop.f32.mrb[0].mxu0
    %v1113 = vpop.f32.mrb[0].mxu0
    %v1114 = vadd.f32 %v633, %v1113
    %v1115 = vpop.f32.mrb[0].mxu0
    %1116 = vdwg.mxu0
    %v1117 = vadd.f32 %v1026, %v1068
    %v1118 = vadd.f32 %v1029, %v1072
    %v1119 = vxor.u32 %v1117, 2147483648
    %v1120 = vxor.u32 %v1118, 2147483648
    %v1121 = vmul.f32 %v1119, 1.442695
    %v1122 = vpow.pop %v1121
    %v1123 = vmul.f32 %v1120, 1.442695
    %v1124 = vpow.pop %v1123
    %v1125 = vadd.f32 %v1122, 1.0
    %v1126 = vadd.f32 %v1124, 1.0
    %v1127 = vrcp.pop %v1125
    %v1128 = vmul.f32 1.0, %v1127
    %v1129 = vrcp.pop %v1126
    %v1130 = vmul.f32 1.0, %v1129
    %v1131 = vadd.f32 %v1027, %v1070
    %v1132 = vadd.f32 %v1030, %v1074
    %v1133 = vxor.u32 %v1131, 2147483648
    %v1134 = vxor.u32 %v1132, 2147483648
    %v1135 = vmul.f32 %v1133, 1.442695
    %v1136 = vpow.pop %v1135
    %v1137 = vmul.f32 %v1134, 1.442695
    %v1138 = vpow.pop %v1137
    %v1139 = vadd.f32 %v1136, 1.0
    %v1140 = vadd.f32 %v1138, 1.0
    %v1141 = vrcp.pop %v1139
    %v1142 = vmul.f32 1.0, %v1141
    %v1143 = vrcp.pop %v1140
    %v1144 = vmul.f32 1.0, %v1143
    %v1145 = vmul.f32 %v1128, %v1111
    %v1146 = vmul.f32 %v1130, %v1114
    %v1147 = vadd.f32 %v1028, %v1145
    %v1148 = vadd.f32 %v1031, %v1146
    %v1149 = vtanh.pop %v1147
    %v1150 = vtanh.pop %v1148
    %v1151 = vsub.f32 1.0, %v1142
    %v1152 = vsub.f32 1.0, %v1144
    %v1153 = vmul.f32 %v1151, %v1149
    %v1154 = vmul.f32 %v1152, %v1150
    %v1155 = vmul.f32 %v1142, %v1023
    %v1156 = vmul.f32 %v1144, %v1024
    %v1157 = vadd.f32 %v1153, %v1155
    %v1158 = vadd.f32 %v1154, %v1156
    %s1159 = scalar_lea.vmem [#allocation2], 144
    %v1160 = vld [vmem:[%s1159] sm:$0xff]
    %v1161 = vld [vmem:[%s1159 + $0x8] sm:$0xff]
    %v1162 = vld [vmem:[%s1159 + $0x10] sm:$0xff]
    %v1163 = vld [vmem:[%s1159 + $0x18] sm:$0xff]
    %v1164 = vld [vmem:[%s1159 + $0x20] sm:$0xff]
    %v1165 = vld [vmem:[%s1159 + $0x28] sm:$0xff]
    %v1166 = vpack.c.bf16 %v1158, %v1157
    %1167 = vmatprep.subr.bf16.mxu0 %v718
    %1168 = vmatpush1.bf16.msra.mxu0 %v717
    %1169 = vmatprep.subr.bf16.mxu0 %v721
    %1170 = vmatpush1.bf16.msra.mxu0 %v720
    %1171 = vmatprep.subr.bf16.mxu0 %v724
    %1172 = vmatpush1.bf16.msra.mxu0 %v723
    %1173 = vmatprep.subr.bf16.mxu0 %v727
    %1174 = vmatpush1.bf16.msra.mxu0 %v726
    %1175 = vmatprep.subr.bf16.mxu0 %v730
    %1176 = vmatpush1.bf16.msra.mxu0 %v729
    %1177 = vmatprep.subr.bf16.mxu0 %v733
    %1178 = vmatpush1.bf16.msra.mxu0 %v732
    %1179 = vmatprep.subr.bf16.mxu0 %v736
    %1180 = vmatpush1.bf16.msra.mxu0 %v735
    %1181 = vmatprep.subr.bf16.mxu0 %v739
    %1182 = vmatpush1.bf16.msra.mxu0 %v738
    %1183 = vmatprep.subr.bf16.mxu0 0
    %1184 = vmatpush1.bf16.msra.mxu0 0
    %1185 = vmatprep.subr.bf16.mxu0 0
    %1186 = vmatpush1.bf16.msra.mxu0 0
    %1187 = vmatprep.subr.bf16.mxu0 0
    %1188 = vmatpush1.bf16.msra.mxu0 0
    %1189 = vmatprep.subr.bf16.mxu0 0
    %1190 = vmatpush1.bf16.msra.mxu0 0
    %1191 = vmatprep.subr.bf16.mxu0 0
    %1192 = vmatpush1.bf16.msra.mxu0 0
    %1193 = vmatprep.subr.bf16.mxu0 0
    %1194 = vmatpush1.bf16.msra.mxu0 0
    %1195 = vmatprep.subr.bf16.mxu0 0
    %1196 = vmatpush1.bf16.msra.mxu0 0
    %1197 = vmatprep.subr.bf16.mxu0 0
    %1198 = vmatpush1.bf16.msra.mxu0 0
    %1199 = vmatprep.mubr.bf16.mxu0 0
    %1200 = vmatmul.mubr.bf16.gmra.mrb[0].mxu0 %v1166
    %v1201 = vpop.f32.mrb[0].mxu0
    %v1202 = vadd.f32 %v625, %v1201
    %v1203 = vpop.f32.mrb[0].mxu0
    %v1204 = vadd.f32 %v629, %v1203
    %v1205 = vpop.f32.mrb[0].mxu0
    %v1206 = vadd.f32 %v625, %v1205
    %v1207 = vpop.f32.mrb[0].mxu0
    %v1208 = vadd.f32 %v629, %v1207
    %1209 = vdwg.mxu0
    %1210 = vmatprep.subr.bf16.mxu0 0
    %1211 = vmatpush1.bf16.msra.mxu0 %v719
    %1212 = vmatprep.subr.bf16.mxu0 0
    %1213 = vmatpush1.bf16.msra.mxu0 %v722
    %1214 = vmatprep.subr.bf16.mxu0 0
    %1215 = vmatpush1.bf16.msra.mxu0 %v725
    %1216 = vmatprep.subr.bf16.mxu0 0
    %1217 = vmatpush1.bf16.msra.mxu0 %v728
    %1218 = vmatprep.subr.bf16.mxu0 0
    %1219 = vmatpush1.bf16.msra.mxu0 %v731
    %1220 = vmatprep.subr.bf16.mxu0 0
    %1221 = vmatpush1.bf16.msra.mxu0 %v734
    %1222 = vmatprep.subr.bf16.mxu0 0
    %1223 = vmatpush1.bf16.msra.mxu0 %v737
    %1224 = vmatprep.subr.bf16.mxu0 0
    %1225 = vmatpush1.bf16.msra.mxu0 %v740
    %1226 = vmatprep.subr.bf16.mxu0 0
    %1227 = vmatpush1.bf16.msra.mxu0 0
    %1228 = vmatprep.subr.bf16.mxu0 0
    %1229 = vmatpush1.bf16.msra.mxu0 0
    %1230 = vmatprep.subr.bf16.mxu0 0
    %1231 = vmatpush1.bf16.msra.mxu0 0
    %1232 = vmatprep.subr.bf16.mxu0 0
    %1233 = vmatpush1.bf16.msra.mxu0 0
    %1234 = vmatprep.subr.bf16.mxu0 0
    %1235 = vmatpush1.bf16.msra.mxu0 0
    %1236 = vmatprep.subr.bf16.mxu0 0
    %1237 = vmatpush1.bf16.msra.mxu0 0
    %1238 = vmatprep.subr.bf16.mxu0 0
    %1239 = vmatpush1.bf16.msra.mxu0 0
    %1240 = vmatprep.subr.bf16.mxu0 0
    %1241 = vmatpush1.bf16.msra.mxu0 0
    %1242 = vmatprep.mubr.bf16.mxu0 0
    %1243 = vmatmul.mubr.bf16.gmra.mrb[0].mxu0 %v1166
    %v1244 = vpop.f32.mrb[0].mxu0
    %v1245 = vadd.f32 %v633, %v1244
    %v1246 = vpop.f32.mrb[0].mxu0
    %v1247 = vpop.f32.mrb[0].mxu0
    %v1248 = vadd.f32 %v633, %v1247
    %v1249 = vpop.f32.mrb[0].mxu0
    %1250 = vdwg.mxu0
    %v1251 = vadd.f32 %v1160, %v1202
    %v1252 = vadd.f32 %v1163, %v1206
    %v1253 = vxor.u32 %v1251, 2147483648
    %v1254 = vxor.u32 %v1252, 2147483648
    %v1255 = vmul.f32 %v1253, 1.442695
    %v1256 = vpow.pop %v1255
    %v1257 = vmul.f32 %v1254, 1.442695
    %v1258 = vpow.pop %v1257
    %v1259 = vadd.f32 %v1256, 1.0
    %v1260 = vadd.f32 %v1258, 1.0
    %v1261 = vrcp.pop %v1259
    %v1262 = vmul.f32 1.0, %v1261
    %v1263 = vrcp.pop %v1260
    %v1264 = vmul.f32 1.0, %v1263
    %v1265 = vadd.f32 %v1161, %v1204
    %v1266 = vadd.f32 %v1164, %v1208
    %v1267 = vxor.u32 %v1265, 2147483648
    %v1268 = vxor.u32 %v1266, 2147483648
    %v1269 = vmul.f32 %v1267, 1.442695
    %v1270 = vpow.pop %v1269
    %v1271 = vmul.f32 %v1268, 1.442695
    %v1272 = vpow.pop %v1271
    %v1273 = vadd.f32 %v1270, 1.0
    %v1274 = vadd.f32 %v1272, 1.0
    %v1275 = vrcp.pop %v1273
    %v1276 = vmul.f32 1.0, %v1275
    %v1277 = vrcp.pop %v1274
    %v1278 = vmul.f32 1.0, %v1277
    %v1279 = vmul.f32 %v1262, %v1245
    %v1280 = vmul.f32 %v1264, %v1248
    %v1281 = vadd.f32 %v1162, %v1279
    %v1282 = vadd.f32 %v1165, %v1280
    %v1283 = vtanh.pop %v1281
    %v1284 = vtanh.pop %v1282
    %v1285 = vsub.f32 1.0, %v1276
    %v1286 = vsub.f32 1.0, %v1278
    %v1287 = vmul.f32 %v1285, %v1283
    %v1288 = vmul.f32 %v1286, %v1284
    %v1289 = vmul.f32 %v1276, %v1157
    %v1290 = vmul.f32 %v1278, %v1158
    %v1291 = vadd.f32 %v1287, %v1289
    %v1292 = vadd.f32 %v1288, %v1290
    %s1293 = scalar_lea.vmem [#allocation2], 192
    %v1294 = vld [vmem:[%s1293] sm:$0xff]
    %v1295 = vld [vmem:[%s1293 + $0x8] sm:$0xff]
    %v1296 = vld [vmem:[%s1293 + $0x10] sm:$0xff]
    %v1297 = vld [vmem:[%s1293 + $0x18] sm:$0xff]
    %v1298 = vld [vmem:[%s1293 + $0x20] sm:$0xff]
    %v1299 = vld [vmem:[%s1293 + $0x28] sm:$0xff]
    %v1300 = vpack.c.bf16 %v1292, %v1291
    %1301 = vmatprep.subr.bf16.mxu0 %v718
    %1302 = vmatpush1.bf16.msra.mxu0 %v717
    %1303 = vmatprep.subr.bf16.mxu0 %v721
    %1304 = vmatpush1.bf16.msra.mxu0 %v720
    %1305 = vmatprep.subr.bf16.mxu0 %v724
    %1306 = vmatpush1.bf16.msra.mxu0 %v723
    %1307 = vmatprep.subr.bf16.mxu0 %v727
    %1308 = vmatpush1.bf16.msra.mxu0 %v726
    %1309 = vmatprep.subr.bf16.mxu0 %v730
    %1310 = vmatpush1.bf16.msra.mxu0 %v729
    %1311 = vmatprep.subr.bf16.mxu0 %v733
    %1312 = vmatpush1.bf16.msra.mxu0 %v732
    %1313 = vmatprep.subr.bf16.mxu0 %v736
    %1314 = vmatpush1.bf16.msra.mxu0 %v735
    %1315 = vmatprep.subr.bf16.mxu0 %v739
    %1316 = vmatpush1.bf16.msra.mxu0 %v738
    %1317 = vmatprep.subr.bf16.mxu0 0
    %1318 = vmatpush1.bf16.msra.mxu0 0
    %1319 = vmatprep.subr.bf16.mxu0 0
    %1320 = vmatpush1.bf16.msra.mxu0 0
    %1321 = vmatprep.subr.bf16.mxu0 0
    %1322 = vmatpush1.bf16.msra.mxu0 0
    %1323 = vmatprep.subr.bf16.mxu0 0
    %1324 = vmatpush1.bf16.msra.mxu0 0
    %1325 = vmatprep.subr.bf16.mxu0 0
    %1326 = vmatpush1.bf16.msra.mxu0 0
    %1327 = vmatprep.subr.bf16.mxu0 0
    %1328 = vmatpush1.bf16.msra.mxu0 0
    %1329 = vmatprep.subr.bf16.mxu0 0
    %1330 = vmatpush1.bf16.msra.mxu0 0
    %1331 = vmatprep.subr.bf16.mxu0 0
    %1332 = vmatpush1.bf16.msra.mxu0 0
    %1333 = vmatprep.mubr.bf16.mxu0 0
    %1334 = vmatmul.mubr.bf16.gmra.mrb[0].mxu0 %v1300
    %v1335 = vpop.f32.mrb[0].mxu0
    %v1336 = vadd.f32 %v625, %v1335
    %v1337 = vpop.f32.mrb[0].mxu0
    %v1338 = vadd.f32 %v629, %v1337
    %v1339 = vpop.f32.mrb[0].mxu0
    %v1340 = vadd.f32 %v625, %v1339
    %v1341 = vpop.f32.mrb[0].mxu0
    %v1342 = vadd.f32 %v629, %v1341
    %1343 = vdwg.mxu0
    %1344 = vmatprep.subr.bf16.mxu0 0
    %1345 = vmatpush1.bf16.msra.mxu0 %v719
    %1346 = vmatprep.subr.bf16.mxu0 0
    %1347 = vmatpush1.bf16.msra.mxu0 %v722
    %1348 = vmatprep.subr.bf16.mxu0 0
    %1349 = vmatpush1.bf16.msra.mxu0 %v725
    %1350 = vmatprep.subr.bf16.mxu0 0
    %1351 = vmatpush1.bf16.msra.mxu0 %v728
    %1352 = vmatprep.subr.bf16.mxu0 0
    %1353 = vmatpush1.bf16.msra.mxu0 %v731
    %1354 = vmatprep.subr.bf16.mxu0 0
    %1355 = vmatpush1.bf16.msra.mxu0 %v734
    %1356 = vmatprep.subr.bf16.mxu0 0
    %1357 = vmatpush1.bf16.msra.mxu0 %v737
    %1358 = vmatprep.subr.bf16.mxu0 0
    %1359 = vmatpush1.bf16.msra.mxu0 %v740
    %1360 = vmatprep.subr.bf16.mxu0 0
    %1361 = vmatpush1.bf16.msra.mxu0 0
    %1362 = vmatprep.subr.bf16.mxu0 0
    %1363 = vmatpush1.bf16.msra.mxu0 0
    %1364 = vmatprep.subr.bf16.mxu0 0
    %1365 = vmatpush1.bf16.msra.mxu0 0
    %1366 = vmatprep.subr.bf16.mxu0 0
    %1367 = vmatpush1.bf16.msra.mxu0 0
    %1368 = vmatprep.subr.bf16.mxu0 0
    %1369 = vmatpush1.bf16.msra.mxu0 0
    %1370 = vmatprep.subr.bf16.mxu0 0
    %1371 = vmatpush1.bf16.msra.mxu0 0
    %1372 = vmatprep.subr.bf16.mxu0 0
    %1373 = vmatpush1.bf16.msra.mxu0 0
    %1374 = vmatprep.subr.bf16.mxu0 0
    %1375 = vmatpush1.bf16.msra.mxu0 0
    %1376 = vmatprep.mubr.bf16.mxu0 0
    %1377 = vmatmul.mubr.bf16.gmra.mrb[0].mxu0 %v1300
    %v1378 = vpop.f32.mrb[0].mxu0
    %v1379 = vadd.f32 %v633, %v1378
    %v1380 = vpop.f32.mrb[0].mxu0
    %v1381 = vpop.f32.mrb[0].mxu0
    %v1382 = vadd.f32 %v633, %v1381
    %v1383 = vpop.f32.mrb[0].mxu0
    %1384 = vdwg.mxu0
    %v1385 = vadd.f32 %v1294, %v1336
    %v1386 = vadd.f32 %v1297, %v1340
    %v1387 = vxor.u32 %v1385, 2147483648
    %v1388 = vxor.u32 %v1386, 2147483648
    %v1389 = vmul.f32 %v1387, 1.442695
    %v1390 = vpow.pop %v1389
    %v1391 = vmul.f32 %v1388, 1.442695
    %v1392 = vpow.pop %v1391
    %v1393 = vadd.f32 %v1390, 1.0
    %v1394 = vadd.f32 %v1392, 1.0
    %v1395 = vrcp.pop %v1393
    %v1396 = vmul.f32 1.0, %v1395
    %v1397 = vrcp.pop %v1394
    %v1398 = vmul.f32 1.0, %v1397
    %v1399 = vadd.f32 %v1295, %v1338
    %v1400 = vadd.f32 %v1298, %v1342
    %v1401 = vxor.u32 %v1399, 2147483648
    %v1402 = vxor.u32 %v1400, 2147483648
    %v1403 = vmul.f32 %v1401, 1.442695
    %v1404 = vpow.pop %v1403
    %v1405 = vmul.f32 %v1402, 1.442695
    %v1406 = vpow.pop %v1405
    %v1407 = vadd.f32 %v1404, 1.0
    %v1408 = vadd.f32 %v1406, 1.0
    %v1409 = vrcp.pop %v1407
    %v1410 = vmul.f32 1.0, %v1409
    %v1411 = vrcp.pop %v1408
    %v1412 = vmul.f32 1.0, %v1411
    %v1413 = vmul.f32 %v1396, %v1379
    %v1414 = vmul.f32 %v1398, %v1382
    %v1415 = vadd.f32 %v1296, %v1413
    %v1416 = vadd.f32 %v1299, %v1414
    %v1417 = vtanh.pop %v1415
    %v1418 = vtanh.pop %v1416
    %v1419 = vsub.f32 1.0, %v1410
    %v1420 = vsub.f32 1.0, %v1412
    %v1421 = vmul.f32 %v1419, %v1417
    %v1422 = vmul.f32 %v1420, %v1418
    %v1423 = vmul.f32 %v1410, %v1291
    %v1424 = vmul.f32 %v1412, %v1292
    %v1425 = vadd.f32 %v1421, %v1423
    %v1426 = vadd.f32 %v1422, %v1424
    %s1427 = scalar_lea.vmem [#allocation2], 240
    %v1428 = vld [vmem:[%s1427] sm:$0xff]
    %v1429 = vld [vmem:[%s1427 + $0x8] sm:$0xff]
    %v1430 = vld [vmem:[%s1427 + $0x10] sm:$0xff]
    %v1431 = vld [vmem:[%s1427 + $0x18] sm:$0xff]
    %v1432 = vld [vmem:[%s1427 + $0x20] sm:$0xff]
    %v1433 = vld [vmem:[%s1427 + $0x28] sm:$0xff]
    %v1434 = vpack.c.bf16 %v1426, %v1425
    %1435 = vmatprep.subr.bf16.mxu0 %v718
    %1436 = vmatpush1.bf16.msra.mxu0 %v717
    %1437 = vmatprep.subr.bf16.mxu0 %v721
    %1438 = vmatpush1.bf16.msra.mxu0 %v720
    %1439 = vmatprep.subr.bf16.mxu0 %v724
    %1440 = vmatpush1.bf16.msra.mxu0 %v723
    %1441 = vmatprep.subr.bf16.mxu0 %v727
    %1442 = vmatpush1.bf16.msra.mxu0 %v726
    %1443 = vmatprep.subr.bf16.mxu0 %v730
    %1444 = vmatpush1.bf16.msra.mxu0 %v729
    %1445 = vmatprep.subr.bf16.mxu0 %v733
    %1446 = vmatpush1.bf16.msra.mxu0 %v732
    %1447 = vmatprep.subr.bf16.mxu0 %v736
    %1448 = vmatpush1.bf16.msra.mxu0 %v735
    %1449 = vmatprep.subr.bf16.mxu0 %v739
    %1450 = vmatpush1.bf16.msra.mxu0 %v738
    %1451 = vmatprep.subr.bf16.mxu0 0
    %1452 = vmatpush1.bf16.msra.mxu0 0
    %1453 = vmatprep.subr.bf16.mxu0 0
    %1454 = vmatpush1.bf16.msra.mxu0 0
    %1455 = vmatprep.subr.bf16.mxu0 0
    %1456 = vmatpush1.bf16.msra.mxu0 0
    %1457 = vmatprep.subr.bf16.mxu0 0
    %1458 = vmatpush1.bf16.msra.mxu0 0
    %1459 = vmatprep.subr.bf16.mxu0 0
    %1460 = vmatpush1.bf16.msra.mxu0 0
    %1461 = vmatprep.subr.bf16.mxu0 0
    %1462 = vmatpush1.bf16.msra.mxu0 0
    %1463 = vmatprep.subr.bf16.mxu0 0
    %1464 = vmatpush1.bf16.msra.mxu0 0
    %1465 = vmatprep.subr.bf16.mxu0 0
    %1466 = vmatpush1.bf16.msra.mxu0 0
    %1467 = vmatprep.mubr.bf16.mxu0 0
    %1468 = vmatmul.mubr.bf16.gmra.mrb[0].mxu0 %v1434
    %v1469 = vpop.f32.mrb[0].mxu0
    %v1470 = vadd.f32 %v625, %v1469
    %v1471 = vpop.f32.mrb[0].mxu0
    %v1472 = vadd.f32 %v629, %v1471
    %v1473 = vpop.f32.mrb[0].mxu0
    %v1474 = vadd.f32 %v625, %v1473
    %v1475 = vpop.f32.mrb[0].mxu0
    %v1476 = vadd.f32 %v629, %v1475
    %1477 = vdwg.mxu0
    %1478 = vmatprep.subr.bf16.mxu0 0
    %1479 = vmatpush1.bf16.msra.mxu0 %v719
    %1480 = vmatprep.subr.bf16.mxu0 0
    %1481 = vmatpush1.bf16.msra.mxu0 %v722
    %1482 = vmatprep.subr.bf16.mxu0 0
    %1483 = vmatpush1.bf16.msra.mxu0 %v725
    %1484 = vmatprep.subr.bf16.mxu0 0
    %1485 = vmatpush1.bf16.msra.mxu0 %v728
    %1486 = vmatprep.subr.bf16.mxu0 0
    %1487 = vmatpush1.bf16.msra.mxu0 %v731
    %1488 = vmatprep.subr.bf16.mxu0 0
    %1489 = vmatpush1.bf16.msra.mxu0 %v734
    %1490 = vmatprep.subr.bf16.mxu0 0
    %1491 = vmatpush1.bf16.msra.mxu0 %v737
    %1492 = vmatprep.subr.bf16.mxu0 0
    %1493 = vmatpush1.bf16.msra.mxu0 %v740
    %1494 = vmatprep.subr.bf16.mxu0 0
    %1495 = vmatpush1.bf16.msra.mxu0 0
    %1496 = vmatprep.subr.bf16.mxu0 0
    %1497 = vmatpush1.bf16.msra.mxu0 0
    %1498 = vmatprep.subr.bf16.mxu0 0
    %1499 = vmatpush1.bf16.msra.mxu0 0
    %1500 = vmatprep.subr.bf16.mxu0 0
    %1501 = vmatpush1.bf16.msra.mxu0 0
    %1502 = vmatprep.subr.bf16.mxu0 0
    %1503 = vmatpush1.bf16.msra.mxu0 0
    %1504 = vmatprep.subr.bf16.mxu0 0
    %1505 = vmatpush1.bf16.msra.mxu0 0
    %1506 = vmatprep.subr.bf16.mxu0 0
    %1507 = vmatpush1.bf16.msra.mxu0 0
    %1508 = vmatprep.subr.bf16.mxu0 0
    %1509 = vmatpush1.bf16.msra.mxu0 0
    %1510 = vmatprep.mubr.bf16.mxu0 0
    %1511 = vmatmul.mubr.bf16.gmra.mrb[0].mxu0 %v1434
    %v1512 = vpop.f32.mrb[0].mxu0
    %v1513 = vadd.f32 %v633, %v1512
    %v1514 = vpop.f32.mrb[0].mxu0
    %v1515 = vpop.f32.mrb[0].mxu0
    %v1516 = vadd.f32 %v633, %v1515
    %v1517 = vpop.f32.mrb[0].mxu0
    %1518 = vdwg.mxu0
    %v1519 = vadd.f32 %v1428, %v1470
    %v1520 = vadd.f32 %v1431, %v1474
    %v1521 = vxor.u32 %v1519, 2147483648
    %v1522 = vxor.u32 %v1520, 2147483648
    %v1523 = vmul.f32 %v1521, 1.442695
    %v1524 = vpow.pop %v1523
    %v1525 = vmul.f32 %v1522, 1.442695
    %v1526 = vpow.pop %v1525
    %v1527 = vadd.f32 %v1524, 1.0
    %v1528 = vadd.f32 %v1526, 1.0
    %v1529 = vrcp.pop %v1527
    %v1530 = vmul.f32 1.0, %v1529
    %v1531 = vrcp.pop %v1528
    %v1532 = vmul.f32 1.0, %v1531
    %v1533 = vadd.f32 %v1429, %v1472
    %v1534 = vadd.f32 %v1432, %v1476
    %v1535 = vxor.u32 %v1533, 2147483648
    %v1536 = vxor.u32 %v1534, 2147483648
    %v1537 = vmul.f32 %v1535, 1.442695
    %v1538 = vpow.pop %v1537
    %v1539 = vmul.f32 %v1536, 1.442695
    %v1540 = vpow.pop %v1539
    %v1541 = vadd.f32 %v1538, 1.0
    %v1542 = vadd.f32 %v1540, 1.0
    %v1543 = vrcp.pop %v1541
    %v1544 = vmul.f32 1.0, %v1543
    %v1545 = vrcp.pop %v1542
    %v1546 = vmul.f32 1.0, %v1545
    %v1547 = vmul.f32 %v1530, %v1513
    %v1548 = vmul.f32 %v1532, %v1516
    %v1549 = vadd.f32 %v1430, %v1547
    %v1550 = vadd.f32 %v1433, %v1548
    %v1551 = vtanh.pop %v1549
    %v1552 = vtanh.pop %v1550
    %v1553 = vsub.f32 1.0, %v1544
    %v1554 = vsub.f32 1.0, %v1546
    %v1555 = vmul.f32 %v1553, %v1551
    %v1556 = vmul.f32 %v1554, %v1552
    %v1557 = vmul.f32 %v1544, %v1425
    %v1558 = vmul.f32 %v1546, %v1426
    %v1559 = vadd.f32 %v1555, %v1557
    %v1560 = vadd.f32 %v1556, %v1558
    %s1561 = scalar_lea.vmem [#allocation2], 288
    %v1562 = vld [vmem:[%s1561] sm:$0xff]
    %v1563 = vld [vmem:[%s1561 + $0x8] sm:$0xff]
    %v1564 = vld [vmem:[%s1561 + $0x10] sm:$0xff]
    %v1565 = vld [vmem:[%s1561 + $0x18] sm:$0xff]
    %v1566 = vld [vmem:[%s1561 + $0x20] sm:$0xff]
    %v1567 = vld [vmem:[%s1561 + $0x28] sm:$0xff]
    %v1568 = vpack.c.bf16 %v1560, %v1559
    %1569 = vmatprep.subr.bf16.mxu0 %v718
    %1570 = vmatpush1.bf16.msra.mxu0 %v717
    %1571 = vmatprep.subr.bf16.mxu0 %v721
    %1572 = vmatpush1.bf16.msra.mxu0 %v720
    %1573 = vmatprep.subr.bf16.mxu0 %v724
    %1574 = vmatpush1.bf16.msra.mxu0 %v723
    %1575 = vmatprep.subr.bf16.mxu0 %v727
    %1576 = vmatpush1.bf16.msra.mxu0 %v726
    %1577 = vmatprep.subr.bf16.mxu0 %v730
    %1578 = vmatpush1.bf16.msra.mxu0 %v729
    %1579 = vmatprep.subr.bf16.mxu0 %v733
    %1580 = vmatpush1.bf16.msra.mxu0 %v732
    %1581 = vmatprep.subr.bf16.mxu0 %v736
    %1582 = vmatpush1.bf16.msra.mxu0 %v735
    %1583 = vmatprep.subr.bf16.mxu0 %v739
    %1584 = vmatpush1.bf16.msra.mxu0 %v738
    %1585 = vmatprep.subr.bf16.mxu0 0
    %1586 = vmatpush1.bf16.msra.mxu0 0
    %1587 = vmatprep.subr.bf16.mxu0 0
    %1588 = vmatpush1.bf16.msra.mxu0 0
    %1589 = vmatprep.subr.bf16.mxu0 0
    %1590 = vmatpush1.bf16.msra.mxu0 0
    %1591 = vmatprep.subr.bf16.mxu0 0
    %1592 = vmatpush1.bf16.msra.mxu0 0
    %1593 = vmatprep.subr.bf16.mxu0 0
    %1594 = vmatpush1.bf16.msra.mxu0 0
    %1595 = vmatprep.subr.bf16.mxu0 0
    %1596 = vmatpush1.bf16.msra.mxu0 0
    %1597 = vmatprep.subr.bf16.mxu0 0
    %1598 = vmatpush1.bf16.msra.mxu0 0
    %1599 = vmatprep.subr.bf16.mxu0 0
    %1600 = vmatpush1.bf16.msra.mxu0 0
    %1601 = vmatprep.mubr.bf16.mxu0 0
    %1602 = vmatmul.mubr.bf16.gmra.mrb[0].mxu0 %v1568
    %v1603 = vpop.f32.mrb[0].mxu0
    %v1604 = vadd.f32 %v625, %v1603
    %v1605 = vpop.f32.mrb[0].mxu0
    %v1606 = vadd.f32 %v629, %v1605
    %v1607 = vpop.f32.mrb[0].mxu0
    %v1608 = vadd.f32 %v625, %v1607
    %v1609 = vpop.f32.mrb[0].mxu0
    %v1610 = vadd.f32 %v629, %v1609
    %1611 = vdwg.mxu0
    %1612 = vmatprep.subr.bf16.mxu0 0
    %1613 = vmatpush1.bf16.msra.mxu0 %v719
    %1614 = vmatprep.subr.bf16.mxu0 0
    %1615 = vmatpush1.bf16.msra.mxu0 %v722
    %1616 = vmatprep.subr.bf16.mxu0 0
    %1617 = vmatpush1.bf16.msra.mxu0 %v725
    %1618 = vmatprep.subr.bf16.mxu0 0
    %1619 = vmatpush1.bf16.msra.mxu0 %v728
    %1620 = vmatprep.subr.bf16.mxu0 0
    %1621 = vmatpush1.bf16.msra.mxu0 %v731
    %1622 = vmatprep.subr.bf16.mxu0 0
    %1623 = vmatpush1.bf16.msra.mxu0 %v734
    %1624 = vmatprep.subr.bf16.mxu0 0
    %1625 = vmatpush1.bf16.msra.mxu0 %v737
    %1626 = vmatprep.subr.bf16.mxu0 0
    %1627 = vmatpush1.bf16.msra.mxu0 %v740
    %1628 = vmatprep.subr.bf16.mxu0 0
    %1629 = vmatpush1.bf16.msra.mxu0 0
    %1630 = vmatprep.subr.bf16.mxu0 0
    %1631 = vmatpush1.bf16.msra.mxu0 0
    %1632 = vmatprep.subr.bf16.mxu0 0
    %1633 = vmatpush1.bf16.msra.mxu0 0
    %1634 = vmatprep.subr.bf16.mxu0 0
    %1635 = vmatpush1.bf16.msra.mxu0 0
    %1636 = vmatprep.subr.bf16.mxu0 0
    %1637 = vmatpush1.bf16.msra.mxu0 0
    %1638 = vmatprep.subr.bf16.mxu0 0
    %1639 = vmatpush1.bf16.msra.mxu0 0
    %1640 = vmatprep.subr.bf16.mxu0 0
    %1641 = vmatpush1.bf16.msra.mxu0 0
    %1642 = vmatprep.subr.bf16.mxu0 0
    %1643 = vmatpush1.bf16.msra.mxu0 0
    %1644 = vmatprep.mubr.bf16.mxu0 0
    %1645 = vmatmul.mubr.bf16.gmra.mrb[0].mxu0 %v1568
    %v1646 = vpop.f32.mrb[0].mxu0
    %v1647 = vadd.f32 %v633, %v1646
    %v1648 = vpop.f32.mrb[0].mxu0
    %v1649 = vpop.f32.mrb[0].mxu0
    %v1650 = vadd.f32 %v633, %v1649
    %v1651 = vpop.f32.mrb[0].mxu0
    %1652 = vdwg.mxu0
    %v1653 = vadd.f32 %v1562, %v1604
    %v1654 = vadd.f32 %v1565, %v1608
    %v1655 = vxor.u32 %v1653, 2147483648
    %v1656 = vxor.u32 %v1654, 2147483648
    %v1657 = vmul.f32 %v1655, 1.442695
    %v1658 = vpow.pop %v1657
    %v1659 = vmul.f32 %v1656, 1.442695
    %v1660 = vpow.pop %v1659
    %v1661 = vadd.f32 %v1658, 1.0
    %v1662 = vadd.f32 %v1660, 1.0
    %v1663 = vrcp.pop %v1661
    %v1664 = vmul.f32 1.0, %v1663
    %v1665 = vrcp.pop %v1662
    %v1666 = vmul.f32 1.0, %v1665
    %v1667 = vadd.f32 %v1563, %v1606
    %v1668 = vadd.f32 %v1566, %v1610
    %v1669 = vxor.u32 %v1667, 2147483648
    %v1670 = vxor.u32 %v1668, 2147483648
    %v1671 = vmul.f32 %v1669, 1.442695
    %v1672 = vpow.pop %v1671
    %v1673 = vmul.f32 %v1670, 1.442695
    %v1674 = vpow.pop %v1673
    %v1675 = vadd.f32 %v1672, 1.0
    %v1676 = vadd.f32 %v1674, 1.0
    %v1677 = vrcp.pop %v1675
    %v1678 = vmul.f32 1.0, %v1677
    %v1679 = vrcp.pop %v1676
    %v1680 = vmul.f32 1.0, %v1679
    %v1681 = vmul.f32 %v1664, %v1647
    %v1682 = vmul.f32 %v1666, %v1650
    %v1683 = vadd.f32 %v1564, %v1681
    %v1684 = vadd.f32 %v1567, %v1682
    %v1685 = vtanh.pop %v1683
    %v1686 = vtanh.pop %v1684
    %v1687 = vsub.f32 1.0, %v1678
    %v1688 = vsub.f32 1.0, %v1680
    %v1689 = vmul.f32 %v1687, %v1685
    %v1690 = vmul.f32 %v1688, %v1686
    %v1691 = vmul.f32 %v1678, %v1559
    %v1692 = vmul.f32 %v1680, %v1560
    %v1693 = vadd.f32 %v1689, %v1691
    %v1694 = vadd.f32 %v1690, %v1692
    %s1695 = scalar_lea.vmem [#allocation2], 336
    %v1696 = vld [vmem:[%s1695] sm:$0xff]
    %v1697 = vld [vmem:[%s1695 + $0x8] sm:$0xff]
    %v1698 = vld [vmem:[%s1695 + $0x10] sm:$0xff]
    %v1699 = vld [vmem:[%s1695 + $0x18] sm:$0xff]
    %v1700 = vld [vmem:[%s1695 + $0x20] sm:$0xff]
    %v1701 = vld [vmem:[%s1695 + $0x28] sm:$0xff]
    %v1702 = vpack.c.bf16 %v1694, %v1693
    %1703 = vmatprep.subr.bf16.mxu0 %v718
    %1704 = vmatpush1.bf16.msra.mxu0 %v717
    %1705 = vmatprep.subr.bf16.mxu0 %v721
    %1706 = vmatpush1.bf16.msra.mxu0 %v720
    %1707 = vmatprep.subr.bf16.mxu0 %v724
    %1708 = vmatpush1.bf16.msra.mxu0 %v723
    %1709 = vmatprep.subr.bf16.mxu0 %v727
    %1710 = vmatpush1.bf16.msra.mxu0 %v726
    %1711 = vmatprep.subr.bf16.mxu0 %v730
    %1712 = vmatpush1.bf16.msra.mxu0 %v729
    %1713 = vmatprep.subr.bf16.mxu0 %v733
    %1714 = vmatpush1.bf16.msra.mxu0 %v732
    %1715 = vmatprep.subr.bf16.mxu0 %v736
    %1716 = vmatpush1.bf16.msra.mxu0 %v735
    %1717 = vmatprep.subr.bf16.mxu0 %v739
    %1718 = vmatpush1.bf16.msra.mxu0 %v738
    %1719 = vmatprep.subr.bf16.mxu0 0
    %1720 = vmatpush1.bf16.msra.mxu0 0
    %1721 = vmatprep.subr.bf16.mxu0 0
    %1722 = vmatpush1.bf16.msra.mxu0 0
    %1723 = vmatprep.subr.bf16.mxu0 0
    %1724 = vmatpush1.bf16.msra.mxu0 0
    %1725 = vmatprep.subr.bf16.mxu0 0
    %1726 = vmatpush1.bf16.msra.mxu0 0
    %1727 = vmatprep.subr.bf16.mxu0 0
    %1728 = vmatpush1.bf16.msra.mxu0 0
    %1729 = vmatprep.subr.bf16.mxu0 0
    %1730 = vmatpush1.bf16.msra.mxu0 0
    %1731 = vmatprep.subr.bf16.mxu0 0
    %1732 = vmatpush1.bf16.msra.mxu0 0
    %1733 = vmatprep.subr.bf16.mxu0 0
    %1734 = vmatpush1.bf16.msra.mxu0 0
    %1735 = vmatprep.mubr.bf16.mxu0 0
    %1736 = vmatmul.mubr.bf16.gmra.mrb[0].mxu0 %v1702
    %v1737 = vpop.f32.mrb[0].mxu0
    %v1738 = vadd.f32 %v625, %v1737
    %v1739 = vpop.f32.mrb[0].mxu0
    %v1740 = vadd.f32 %v629, %v1739
    %v1741 = vpop.f32.mrb[0].mxu0
    %v1742 = vadd.f32 %v625, %v1741
    %v1743 = vpop.f32.mrb[0].mxu0
    %v1744 = vadd.f32 %v629, %v1743
    %1745 = vdwg.mxu0
    %1746 = vmatprep.subr.bf16.mxu0 0
    %1747 = vmatpush1.bf16.msra.mxu0 %v719
    %1748 = vmatprep.subr.bf16.mxu0 0
    %1749 = vmatpush1.bf16.msra.mxu0 %v722
    %1750 = vmatprep.subr.bf16.mxu0 0
    %1751 = vmatpush1.bf16.msra.mxu0 %v725
    %1752 = vmatprep.subr.bf16.mxu0 0
    %1753 = vmatpush1.bf16.msra.mxu0 %v728
    %1754 = vmatprep.subr.bf16.mxu0 0
    %1755 = vmatpush1.bf16.msra.mxu0 %v731
    %1756 = vmatprep.subr.bf16.mxu0 0
    %1757 = vmatpush1.bf16.msra.mxu0 %v734
    %1758 = vmatprep.subr.bf16.mxu0 0
    %1759 = vmatpush1.bf16.msra.mxu0 %v737
    %1760 = vmatprep.subr.bf16.mxu0 0
    %1761 = vmatpush1.bf16.msra.mxu0 %v740
    %1762 = vmatprep.subr.bf16.mxu0 0
    %1763 = vmatpush1.bf16.msra.mxu0 0
    %1764 = vmatprep.subr.bf16.mxu0 0
    %1765 = vmatpush1.bf16.msra.mxu0 0
    %1766 = vmatprep.subr.bf16.mxu0 0
    %1767 = vmatpush1.bf16.msra.mxu0 0
    %1768 = vmatprep.subr.bf16.mxu0 0
    %1769 = vmatpush1.bf16.msra.mxu0 0
    %1770 = vmatprep.subr.bf16.mxu0 0
    %1771 = vmatpush1.bf16.msra.mxu0 0
    %1772 = vmatprep.subr.bf16.mxu0 0
    %1773 = vmatpush1.bf16.msra.mxu0 0
    %1774 = vmatprep.subr.bf16.mxu0 0
    %1775 = vmatpush1.bf16.msra.mxu0 0
    %1776 = vmatprep.subr.bf16.mxu0 0
    %1777 = vmatpush1.bf16.msra.mxu0 0
    %1778 = vmatprep.mubr.bf16.mxu0 0
    %1779 = vmatmul.mubr.bf16.gmra.mrb[0].mxu0 %v1702
    %v1780 = vpop.f32.mrb[0].mxu0
    %v1781 = vadd.f32 %v633, %v1780
    %v1782 = vpop.f32.mrb[0].mxu0
    %v1783 = vpop.f32.mrb[0].mxu0
    %v1784 = vadd.f32 %v633, %v1783
    %v1785 = vpop.f32.mrb[0].mxu0
    %1786 = vdwg.mxu0
    %v1787 = vadd.f32 %v1696, %v1738
    %v1788 = vadd.f32 %v1699, %v1742
    %v1789 = vxor.u32 %v1787, 2147483648
    %v1790 = vxor.u32 %v1788, 2147483648
    %v1791 = vmul.f32 %v1789, 1.442695
    %v1792 = vpow.pop %v1791
    %v1793 = vmul.f32 %v1790, 1.442695
    %v1794 = vpow.pop %v1793
    %v1795 = vadd.f32 %v1792, 1.0
    %v1796 = vadd.f32 %v1794, 1.0
    %v1797 = vrcp.pop %v1795
    %v1798 = vmul.f32 1.0, %v1797
    %v1799 = vrcp.pop %v1796
    %v1800 = vmul.f32 1.0, %v1799
    %v1801 = vadd.f32 %v1697, %v1740
    %v1802 = vadd.f32 %v1700, %v1744
    %v1803 = vxor.u32 %v1801, 2147483648
    %v1804 = vxor.u32 %v1802, 2147483648
    %v1805 = vmul.f32 %v1803, 1.442695
    %v1806 = vpow.pop %v1805
    %v1807 = vmul.f32 %v1804, 1.442695
    %v1808 = vpow.pop %v1807
    %v1809 = vadd.f32 %v1806, 1.0
    %v1810 = vadd.f32 %v1808, 1.0
    %v1811 = vrcp.pop %v1809
    %v1812 = vmul.f32 1.0, %v1811
    %v1813 = vrcp.pop %v1810
    %v1814 = vmul.f32 1.0, %v1813
    %v1815 = vmul.f32 %v1798, %v1781
    %v1816 = vmul.f32 %v1800, %v1784
    %v1817 = vadd.f32 %v1698, %v1815
    %v1818 = vadd.f32 %v1701, %v1816
    %v1819 = vtanh.pop %v1817
    %v1820 = vtanh.pop %v1818
    %v1821 = vsub.f32 1.0, %v1812
    %v1822 = vsub.f32 1.0, %v1814
    %v1823 = vmul.f32 %v1821, %v1819
    %v1824 = vmul.f32 %v1822, %v1820
    %v1825 = vmul.f32 %v1812, %v1693
    %v1826 = vmul.f32 %v1814, %v1694
    %v1827 = vadd.f32 %v1823, %v1825
    %v1828 = vadd.f32 %v1824, %v1826
    %v1829 = vmax.f32 %v1827, 0.0
    %v1830 = vmax.f32 %v1828, 0.0
    %v1831 = vpack.c.bf16 %v1830, %v1829
    %v1832 = vld [vmem:[#allocation9] sm:$0xf]
    %v1833 = vld [vmem:[#allocation9 + $0x4] sm:$0xf]
    %v1834 = vld [vmem:[#allocation9 + $0x8] sm:$0xf]
    %v1835 = vld [vmem:[#allocation9 + $0xc] sm:$0xf]
    %v1836 = vld [vmem:[#allocation9 + $0x10] sm:$0xf]
    %v1837 = vld [vmem:[#allocation9 + $0x14] sm:$0xf]
    %v1838 = vld [vmem:[#allocation9 + $0x18] sm:$0xf]
    %v1839 = vld [vmem:[#allocation9 + $0x1c] sm:$0xf]
    %v1840 = vld [vmem:[#allocation9 + $0x20] sm:$0xf]
    %v1841 = vld [vmem:[#allocation9 + $0x24] sm:$0xf]
    %v1842 = vld [vmem:[#allocation9 + $0x28] sm:$0xf]
    %v1843 = vld [vmem:[#allocation9 + $0x2c] sm:$0xf]
    %v1844 = vld [vmem:[#allocation9 + $0x30] sm:$0xf]
    %v1845 = vld [vmem:[#allocation9 + $0x34] sm:$0xf]
    %v1846 = vld [vmem:[#allocation9 + $0x38] sm:$0xf]
    %v1847 = vld [vmem:[#allocation9 + $0x3c] sm:$0xf]
    %v1848 = vld [vmem:[%s6] sm:$0x1]
    %v1850 = vlaneseq
    %v1851 = vshrl.u32 %v1850, 7
    %v1852 = vsub.s32 0, %v1851
    %v1853 = vrot.slane %v1848, %v1852
    %v1871 = vunpack.c.l.b16 %v1832
    %v1872 = vunpack.c.l.b16 %v1833
    %v1873 = vunpack.c.l.b16 %v1834
    %v1874 = vunpack.c.l.b16 %v1835
    %v1875 = vunpack.c.l.b16 %v1836
    %v1876 = vunpack.c.l.b16 %v1837
    %v1877 = vunpack.c.l.b16 %v1838
    %v1878 = vunpack.c.l.b16 %v1839
    %v1879 = vunpack.c.l.b16 %v1840
    %v1880 = vunpack.c.l.b16 %v1841
    %v1881 = vunpack.c.l.b16 %v1842
    %v1882 = vunpack.c.l.b16 %v1843
    %v1883 = vunpack.c.l.b16 %v1844
    %v1884 = vunpack.c.l.b16 %v1845
    %v1885 = vunpack.c.l.b16 %v1846
    %v1886 = vunpack.c.l.b16 %v1847
    %v1887 = vpack.c.b16 %v1872, %v1871
    %v1888 = vpack.c.b16 %v1874, %v1873
    %v1889 = vpack.c.b16 %v1876, %v1875
    %v1890 = vpack.c.b16 %v1878, %v1877
    %v1891 = vpack.c.b16 %v1880, %v1879
    %v1892 = vpack.c.b16 %v1882, %v1881
    %v1893 = vpack.c.b16 %v1884, %v1883
    %v1894 = vpack.c.b16 %v1886, %v1885
    %1903 = vmatprep.subr.bf16.mxu0 0
    %1904 = vmatpush1.bf16.msra.mxu0 %v1887
    %1905 = vmatprep.subr.bf16.mxu0 0
    %1906 = vmatpush1.bf16.msra.mxu0 %v1888
    %1907 = vmatprep.subr.bf16.mxu0 0
    %1908 = vmatpush1.bf16.msra.mxu0 %v1889
    %1909 = vmatprep.subr.bf16.mxu0 0
    %1910 = vmatpush1.bf16.msra.mxu0 %v1890
    %1911 = vmatprep.subr.bf16.mxu0 0
    %1912 = vmatpush1.bf16.msra.mxu0 %v1891
    %1913 = vmatprep.subr.bf16.mxu0 0
    %1914 = vmatpush1.bf16.msra.mxu0 %v1892
    %1915 = vmatprep.subr.bf16.mxu0 0
    %1916 = vmatpush1.bf16.msra.mxu0 %v1893
    %1917 = vmatprep.subr.bf16.mxu0 0
    %1918 = vmatpush1.bf16.msra.mxu0 %v1894
    %1919 = vmatprep.subr.bf16.mxu0 0
    %1920 = vmatpush1.bf16.msra.mxu0 0
    %1921 = vmatprep.subr.bf16.mxu0 0
    %1922 = vmatpush1.bf16.msra.mxu0 0
    %1923 = vmatprep.subr.bf16.mxu0 0
    %1924 = vmatpush1.bf16.msra.mxu0 0
    %1925 = vmatprep.subr.bf16.mxu0 0
    %1926 = vmatpush1.bf16.msra.mxu0 0
    %1927 = vmatprep.subr.bf16.mxu0 0
    %1928 = vmatpush1.bf16.msra.mxu0 0
    %1929 = vmatprep.subr.bf16.mxu0 0
    %1930 = vmatpush1.bf16.msra.mxu0 0
    %1931 = vmatprep.subr.bf16.mxu0 0
    %1932 = vmatpush1.bf16.msra.mxu0 0
    %1933 = vmatprep.subr.bf16.mxu0 0
    %1934 = vmatpush1.bf16.msra.mxu0 0
    %1935 = vmatprep.mubr.bf16.mxu0 0
    %1936 = vmatmul.mubr.bf16.gmra.mrb[0].mxu0 %v1831
    %v1937 = vpop.f32.mrb[0].mxu0
    %v1938 = vadd.f32 %v1853, %v1937
    %v1939 = vpop.f32.mrb[0].mxu0
    %v1940 = vpop.f32.mrb[0].mxu0
    %v1941 = vadd.f32 %v1853, %v1940
    %v1942 = vpop.f32.mrb[0].mxu0
    %1943 = vdwg.mxu0
    %1944 = vst [vmem:[#allocation11] sm:$0xff] %v1938
    %1945 = vst [vmem:[#allocation11 + $0x8] sm:$0xff] %v1941
    // Predicated region
    $region46: #{tpu_custom_call.1} parent=1 // pred_check
      _
    $region47: #{tpu_custom_call.1} parent=1 // pred_check_branch
      %1947 = sbr.rel (0) target = $region49
    $region48: #{tpu_custom_call.1} parent=1 // pred_region
      %s1949 = ssub.s32 256, 256
      %1950 = vsyncadd [#allocation5], %s1949
      %s1951 = sshll.u32 [#allocation11], 4
      %s1952 = int_to_ptr.vmem [resolvable:$true] %s1951
      %1957 = dma.vmem_to_hbm [thread:$0]  %s1952, 256, %s7, [#allocation5], 128, 128, 8
    $region49: #{tpu_custom_call.1} parent=1 // pred_fallthru
      _
    // Predicated region
    $region50: #{tpu_custom_call.1} parent=1 // pred_check
      _
    $region51: #{tpu_custom_call.1} parent=1 // pred_check_branch
      %1959 = sbr.rel (0) target = $region53
    $region52: #{tpu_custom_call.1} parent=1 // pred_region
      %1960 = dma.done [#allocation5], 256
    $region53: #{tpu_custom_call.1} parent=1 // pred_fallthru
      _
    %1961 = vsyncpa [#allocation4], 1
    %1962 = vsyncpa [#allocation7], 1
    %1963 = vsyncpa [#allocation10], 1
    %1964 = vsyncpa [#allocation5], 1

</llo_original>
